<compile_context>
chip_gen: v7x
topology: tpu7x:2x2x1
jax: 0.10.0
libtpu: 0.0.40
codegen_flags: <defaults>
</compile_context>

<pallas_src>
import functools

import jax
import jax.numpy as jnp
from jax.experimental import pallas as pl
from jax.experimental.pallas import tpu as pltpu


# ----------------------------- in-kernel helpers -----------------------------

def _layernorm_f32(x, g, b, eps):
    """x: (M, H) f32; g, b: (1, H) f32."""
    mu = jnp.mean(x, axis=-1, keepdims=True)
    var = jnp.mean((x - mu) ** 2, axis=-1, keepdims=True)
    return (x - mu) * jax.lax.rsqrt(var + eps) * g + b


def _gelu_tanh(x):
    # TODO(synk): HuggingFace default BERT uses exact erf GELU; tanh approx
    # ("gelu_new") is kept for a robust Mosaic lowering (and to stay off the EUP
    # roofline at large S).
    return 0.5 * x * (1.0 + jnp.tanh(0.7978845608028654 * (x + 0.044715 * x * x * x)))


# ----------------------------- Pallas kernels -----------------------------

def _embed_ln_kernel(x_ref, g_ref, b_ref, o_ref, *, eps):
    """Embedding layernorm over the whole (B*S, H) slab in one step."""
    y = _layernorm_f32(x_ref[...].astype(jnp.float32), g_ref[...], b_ref[...], eps)
    o_ref[...] = y.astype(o_ref.dtype)


def _encoder_layer_kernel(x_ref, mask_ref,
                          wqkv_ref, bqkv_ref, wo_ref, bo_ref,
                          ln1g_ref, ln1b_ref,
                          w1_ref, b1_ref, w2_ref, b2_ref,
                          ln2g_ref, ln2b_ref,
                          o_ref, *, bt, s, nh, hd, scale, eps):
    """One full BERT encoder layer for a block of `bt` batch elements.

    x_ref: (bt*S, H) bf16 (rows are batch-major), mask_ref: (bt*nh, 1, S) f32
    additive mask (b-major then head), matmul weights bf16, biases / LN f32.
    """
    H = nh * hd
    xf = x_ref[...]                               # (M, H) bf16,  M = bt*S
    mask = mask_ref[...]                          # (G, 1, S) f32, G = bt*nh

    # ---- fused QKV projection: ONE (M,H)@(H,3H) MXU matmul at M = bt*S ----
    qkv = jnp.dot(xf, wqkv_ref[...], preferred_element_type=jnp.float32)
    qkv = qkv + bqkv_ref[...]                     # (M, 3H) f32

    # ---- head-batched attention: gather (G, S, hd) operands once, then two
    #      batched dot_generals (no per-head serialized matmul chain) ----
    def gather(col0):
        return jnp.stack(
            [qkv[b * s:(b + 1) * s, col0 + h * hd:col0 + (h + 1) * hd]
             for b in range(bt) for h in range(nh)], axis=0)   # (G, S, hd)

    q = gather(0)
    k = gather(H)
    v = gather(2 * H)

    sc = jnp.einsum('gqd,gkd->gqk', q, k,
                    preferred_element_type=jnp.float32) * scale + mask   # (G,S,S)
    sc = sc - jnp.max(sc, axis=-1, keepdims=True)
    p = jnp.exp(sc)
    p = p * pl.reciprocal(jnp.sum(p, axis=-1, keepdims=True), approx=True)
    ctx = jnp.einsum('gqk,gkd->gqd', p, v,
                     preferred_element_type=jnp.float32)                 # (G,S,hd)

    # Reassemble the (M, H) context slab (heads concatenated along lanes).
    ctx_full = jnp.concatenate(
        [jnp.concatenate([ctx[b * nh + h] for h in range(nh)], axis=-1)
         for b in range(bt)], axis=0)                                    # (M, H) f32

    # ---- SINGLE output projection matmul (K = H) + bias ----
    attn = jnp.dot(ctx_full.astype(wo_ref.dtype), wo_ref[...],
                   preferred_element_type=jnp.float32) + bo_ref[...]

    # ---- residual add + layernorm 1 (f32) ----
    y = _layernorm_f32(xf.astype(jnp.float32) + attn,
                       ln1g_ref[...], ln1b_ref[...], eps)                # (M, H) f32

    # ---- feed-forward at M = bt*S rows, fused bias + GELU epilogue ----
    # TODO(synk): at real BERT-base sizes on v7x (64 MiB VMEM) tile the
    # intermediate dimension here instead of keeping h1 fully resident.
    h1 = jnp.dot(y.astype(w1_ref.dtype), w1_ref[...],
                 preferred_element_type=jnp.float32) + b1_ref[...]
    h1 = _gelu_tanh(h1)
    h2 = jnp.dot(h1.astype(w2_ref.dtype), w2_ref[...],
                 preferred_element_type=jnp.float32) + b2_ref[...]

    # ---- residual add + layernorm 2 ----
    z = _layernorm_f32(y + h2, ln2g_ref[...], ln2b_ref[...], eps)
    o_ref[...] = z.astype(o_ref.dtype)


# ----------------------------- pallas_call wrappers -----------------------------

def embed_layernorm(emb2d, gamma, beta, eps=1e-12):
    """emb2d: (B*S, H) f32 -> (B*S, H) bf16, single grid step."""
    M, H = emb2d.shape
    return pl.pallas_call(
        functools.partial(_embed_ln_kernel, eps=eps),
        out_shape=jax.ShapeDtypeStruct((M, H), jnp.bfloat16),
        compiler_params=pltpu.CompilerParams(vmem_limit_bytes=32 * 1024 * 1024),
    )(emb2d, gamma, beta)


def encoder_layer(x2d, mask_bh, lp, *, B, S, nh, hd, bt, eps=1e-12):
    """x2d: (B*S, H) bf16; mask_bh: (B*nh, 1, S) f32 additive mask (b-major)."""
    M, H = x2d.shape
    inter = lp["w1"].shape[1]
    scale = 1.0 / (hd ** 0.5)
    n_blocks = B // bt
    G = bt * nh

    # Advisory cost estimate for the XLA scheduler.
    flops = 2 * M * H * (3 * H + H + 2 * inter) + 4 * B * nh * S * S * hd
    transcendentals = B * nh * S * S + M * inter
    bytes_accessed = 2 * x2d.size * x2d.dtype.itemsize + sum(
        v.size * v.dtype.itemsize for v in lp.values())

    def full_spec(a):
        nd = a.ndim
        return pl.BlockSpec(a.shape, lambda i, _nd=nd: (0,) * _nd)

    return pl.pallas_call(
        functools.partial(_encoder_layer_kernel, bt=bt, s=S, nh=nh, hd=hd,
                          scale=scale, eps=eps),
        out_shape=jax.ShapeDtypeStruct((M, H), jnp.bfloat16),
        grid=(n_blocks,),
        in_specs=[
            pl.BlockSpec((bt * S, H), lambda i: (i, 0)),      # activation slab
            pl.BlockSpec((G, 1, S), lambda i: (i, 0, 0)),     # additive mask
            full_spec(lp["wqkv"]), full_spec(lp["bqkv"]),
            full_spec(lp["wo"]), full_spec(lp["bo"]),
            full_spec(lp["ln1_g"]), full_spec(lp["ln1_b"]),
            full_spec(lp["w1"]), full_spec(lp["b1"]),
            full_spec(lp["w2"]), full_spec(lp["b2"]),
            full_spec(lp["ln2_g"]), full_spec(lp["ln2_b"]),
        ],
        out_specs=pl.BlockSpec((bt * S, H), lambda i: (i, 0)),
        compiler_params=pltpu.CompilerParams(
            dimension_semantics=("parallel",),
            vmem_limit_bytes=32 * 1024 * 1024),
        cost_estimate=pl.CostEstimate(flops=flops,
                                      transcendentals=transcendentals,
                                      bytes_accessed=bytes_accessed),
    )(x2d, mask_bh, lp["wqkv"], lp["bqkv"], lp["wo"], lp["bo"],
      lp["ln1_g"], lp["ln1_b"], lp["w1"], lp["b1"], lp["w2"], lp["b2"],
      lp["ln2_g"], lp["ln2_b"])


# ----------------------------- model definition -----------------------------

CFG = dict(
    vocab_size=128,
    max_pos=32,
    type_vocab=2,
    hidden=32,
    heads=2,
    head_dim=16,
    intermediate=64,
    layers=2,
    num_labels=2,
)


def init_params(key, cfg):
    """Deterministic synthetic BERT parameters (normal(0, 0.02) like BERT init).

    Encoder matmul weights are bf16 (MXU-friendly); biases and layernorm
    parameters stay f32, pre-shaped to (1, N).
    """
    H, I = cfg["hidden"], cfg["intermediate"]

    def nrm(k, shape):
        return 0.02 * jax.random.normal(k, shape, dtype=jnp.float32)

    keys = iter(jax.random.split(key, 256))
    p = {
        "tok_emb": nrm(next(keys), (cfg["vocab_size"], H)),
        "pos_emb": nrm(next(keys), (cfg["max_pos"], H)),
        "type_emb": nrm(next(keys), (cfg["type_vocab"], H)),
        "emb_ln_g": jnp.ones((1, H), jnp.float32),
        "emb_ln_b": jnp.zeros((1, H), jnp.float32),
        "layers": [],
        "pool_w": nrm(next(keys), (H, H)),
        "pool_b": jnp.zeros((H,), jnp.float32),
        "cls_w": nrm(next(keys), (H, cfg["num_labels"])),
        "cls_b": jnp.zeros((cfg["num_labels"],), jnp.float32),
    }
    for _ in range(cfg["layers"]):
        wq = nrm(next(keys), (H, H))
        wk = nrm(next(keys), (H, H))
        wv = nrm(next(keys), (H, H))
        lp = {
            "wqkv": jnp.concatenate([wq, wk, wv], axis=1).astype(jnp.bfloat16),
            "bqkv": jnp.zeros((1, 3 * H), jnp.float32),
            "wo": nrm(next(keys), (H, H)).astype(jnp.bfloat16),
            "bo": jnp.zeros((1, H), jnp.float32),
            "ln1_g": jnp.ones((1, H), jnp.float32),
            "ln1_b": jnp.zeros((1, H), jnp.float32),
            "w1": nrm(next(keys), (H, I)).astype(jnp.bfloat16),
            "b1": jnp.zeros((1, I), jnp.float32),
            "w2": nrm(next(keys), (I, H)).astype(jnp.bfloat16),
            "b2": jnp.zeros((1, H), jnp.float32),
            "ln2_g": jnp.ones((1, H), jnp.float32),
            "ln2_b": jnp.zeros((1, H), jnp.float32),
        }
        p["layers"].append(lp)
    return p


def _pick_batch_block(B, max_bt=8):
    """Largest divisor of B that is <= max_bt (keeps bt*S rows per grid step)."""
    for cand in range(min(B, max_bt), 0, -1):
        if B % cand == 0:
            return cand
    return 1


def bert_forward(params, input_ids, attention_mask, cfg=CFG):
    """Returns classification logits of shape (B, num_labels)."""
    B, S = input_ids.shape
    H = cfg["hidden"]
    nh, hd = cfg["heads"], cfg["head_dim"]

    # --- embeddings (gathers + sum are glue) ---
    # TODO(synk): token_type_ids are assumed all-zero (type_emb[0]).
    positions = jnp.arange(S)
    emb = (jnp.take(params["tok_emb"], input_ids, axis=0)
           + params["pos_emb"][positions][None, :, :]
           + params["type_emb"][0][None, None, :])            # (B, S, H) f32

    # Embedding layernorm over the flat (B*S, H) slab — one grid step.
    x = embed_layernorm(emb.reshape(B * S, H),
                        params["emb_ln_g"], params["emb_ln_b"])   # (B*S, H) bf16

    # Additive attention mask, pre-broadcast over heads (b-major then head):
    # shape (B*nh, 1, S); 0 keep, -1e9 pad.
    add = ((1.0 - attention_mask.astype(jnp.float32)) * -1e9)[:, None, None, :]
    mask_bh = jnp.broadcast_to(add, (B, nh, 1, S)).reshape(B * nh, 1, S)

    # --- fused encoder layers (one pallas_call per layer, bt elems per step) ---
    bt = _pick_batch_block(B)
    for lp in params["layers"]:
        x = encoder_layer(x, mask_bh, lp, B=B, S=S, nh=nh, hd=hd, bt=bt)

    # --- pooler (CLS token) + classifier head: tiny GEMVs, left to XLA ---
    cls = x.reshape(B, S, H)[:, 0, :].astype(jnp.float32)      # (B, H)
    pooled = jnp.tanh(cls @ params["pool_w"] + params["pool_b"])
    logits = pooled @ params["cls_w"] + params["cls_b"]         # (B, num_labels)
    return logits


# ----------------------------- main -----------------------------

if __name__ == "__main__":
    key = jax.random.PRNGKey(0)
    k_param, k_ids = jax.random.split(key)

    B, S = 2, 8
    params = init_params(k_param, CFG)

    input_ids = jax.random.randint(k_ids, (B, S), 0, CFG["vocab_size"], dtype=jnp.int32)
    # second sequence has 2 padding tokens at the end to exercise the mask
    attention_mask = jnp.array(
        [[1, 1, 1, 1, 1, 1, 1, 1],
         [1, 1, 1, 1, 1, 1, 0, 0]], dtype=jnp.int32)

    logits = jax.jit(bert_forward)(params, input_ids, attention_mask)
    logits = jax.block_until_ready(logits)

    assert logits.shape == (B, CFG["num_labels"])
    assert bool(jnp.all(jnp.isfinite(logits)))
    print("KERNEL_OK")
</pallas_src>

<mosaic_0001>
module attributes {stable_mosaic.version = 11 : i64} {
  func.func @_embed_ln_kernel(%arg0: memref<16x32xf32, #tpu.memory_space<vmem>>, %arg1: memref<1x32xf32, #tpu.memory_space<vmem>>, %arg2: memref<1x32xf32, #tpu.memory_space<vmem>>, %arg3: memref<16x32xbf16, #tpu.memory_space<vmem>>) attributes {dimension_semantics = [], scalar_prefetch = 0 : i64, scratch_operands = 0 : i64, tpu.core_type = #tpu.core_type<tc>} {
    %c0 = arith.constant 0 : index
    %c0_0 = arith.constant 0 : index
    %0 = vector.load %arg0[%c0, %c0_0] : memref<16x32xf32, #tpu.memory_space<vmem>>, vector<16x32xf32>
    %c0_1 = arith.constant 0 : index
    %c0_2 = arith.constant 0 : index
    %1 = vector.load %arg1[%c0_1, %c0_2] : memref<1x32xf32, #tpu.memory_space<vmem>>, vector<1x32xf32>
    %c0_3 = arith.constant 0 : index
    %c0_4 = arith.constant 0 : index
    %2 = vector.load %arg2[%c0_3, %c0_4] : memref<1x32xf32, #tpu.memory_space<vmem>>, vector<1x32xf32>
    %cst = arith.constant dense<0.000000e+00> : vector<16xf32>
    %3 = vector.multi_reduction <add>, %0, %cst [1] : vector<16x32xf32> to vector<16xf32>
    %4 = vector.shape_cast %3 : vector<16xf32> to vector<16x1xf32>
    %cst_5 = arith.constant 3.200000e+01 : f32
    %5 = vector.broadcast %cst_5 : f32 to vector<16x1xf32>
    %6 = arith.divf %4, %5 : vector<16x1xf32>
    %7 = vector.broadcast %6 : vector<16x1xf32> to vector<16x32xf32>
    %8 = arith.subf %0, %7 : vector<16x32xf32>
    %9 = arith.mulf %8, %8 : vector<16x32xf32>
    %cst_6 = arith.constant dense<0.000000e+00> : vector<16xf32>
    %10 = vector.multi_reduction <add>, %9, %cst_6 [1] : vector<16x32xf32> to vector<16xf32>
    %11 = vector.shape_cast %10 : vector<16xf32> to vector<16x1xf32>
    %cst_7 = arith.constant 3.200000e+01 : f32
    %12 = vector.broadcast %cst_7 : f32 to vector<16x1xf32>
    %13 = arith.divf %11, %12 : vector<16x1xf32>
    %14 = vector.broadcast %6 : vector<16x1xf32> to vector<16x32xf32>
    %15 = arith.subf %0, %14 : vector<16x32xf32>
    %cst_8 = arith.constant 9.99999996E-13 : f32
    %16 = vector.broadcast %cst_8 : f32 to vector<16x1xf32>
    %17 = arith.addf %13, %16 : vector<16x1xf32>
    %18 = math.rsqrt %17 : vector<16x1xf32>
    %19 = vector.broadcast %18 : vector<16x1xf32> to vector<16x32xf32>
    %20 = arith.mulf %15, %19 : vector<16x32xf32>
    %21 = vector.broadcast %1 : vector<1x32xf32> to vector<16x32xf32>
    %22 = arith.mulf %20, %21 : vector<16x32xf32>
    %23 = vector.broadcast %2 : vector<1x32xf32> to vector<16x32xf32>
    %24 = arith.addf %22, %23 : vector<16x32xf32>
    %25 = arith.truncf %24 : vector<16x32xf32> to vector<16x32xbf16>
    %c0_9 = arith.constant 0 : index
    %c0_10 = arith.constant 0 : index
    %26 = vector.load %arg3[%c0_9, %c0_10] : memref<16x32xbf16, #tpu.memory_space<vmem>>, vector<16x32xbf16>
    tpu.vector_store %arg3[%c0_9, %c0_10], %25 {strides = array<i32>} : memref<16x32xbf16, #tpu.memory_space<vmem>>, vector<16x32xbf16>,
    return
  }
}

module attributes {stable_mosaic.version = 11 : i64} {
  func.func @_encoder_layer_kernel(%arg0: i32, %arg1: memref<16x32xbf16, #tpu.memory_space<vmem>>, %arg2: memref<4x1x8xf32, #tpu.memory_space<vmem>>, %arg3: memref<32x96xbf16, #tpu.memory_space<vmem>>, %arg4: memref<1x96xf32, #tpu.memory_space<vmem>>, %arg5: memref<32x32xbf16, #tpu.memory_space<vmem>>, %arg6: memref<1x32xf32, #tpu.memory_space<vmem>>, %arg7: memref<1x32xf32, #tpu.memory_space<vmem>>, %arg8: memref<1x32xf32, #tpu.memory_space<vmem>>, %arg9: memref<32x64xbf16, #tpu.memory_space<vmem>>, %arg10: memref<1x64xf32, #tpu.memory_space<vmem>>, %arg11: memref<64x32xbf16, #tpu.memory_space<vmem>>, %arg12: memref<1x32xf32, #tpu.memory_space<vmem>>, %arg13: memref<1x32xf32, #tpu.memory_space<vmem>>, %arg14: memref<1x32xf32, #tpu.memory_space<vmem>>, %arg15: memref<16x32xbf16, #tpu.memory_space<vmem>>) attributes {dimension_semantics = [#tpu.dimension_semantics<parallel>], iteration_bounds = array<i64: 1>, scalar_prefetch = 0 : i64, scratch_operands = 0 : i64, tpu.core_type = #tpu.core_type<tc>, window_params = [{transform_indices = @transform_0, window_bounds = array<i64: 16, 32>}, {transform_indices = @transform_1, window_bounds = array<i64: 4, 1, 8>}, {pipeline_mode = #tpu.pipeline_mode<synchronous>, transform_indices = @transform_2, window_bounds = array<i64: 32, 96>}, {pipeline_mode = #tpu.pipeline_mode<synchronous>, transform_indices = @transform_3, window_bounds = array<i64: 1, 96>}, {pipeline_mode = #tpu.pipeline_mode<synchronous>, transform_indices = @transform_4, window_bounds = array<i64: 32, 32>}, {pipeline_mode = #tpu.pipeline_mode<synchronous>, transform_indices = @transform_5, window_bounds = array<i64: 1, 32>}, {pipeline_mode = #tpu.pipeline_mode<synchronous>, transform_indices = @transform_6, window_bounds = array<i64: 1, 32>}, {pipeline_mode = #tpu.pipeline_mode<synchronous>, transform_indices = @transform_7, window_bounds = array<i64: 1, 32>}, {pipeline_mode = #tpu.pipeline_mode<synchronous>, transform_indices = @transform_8, window_bounds = array<i64: 32, 64>}, {pipeline_mode = #tpu.pipeline_mode<synchronous>, transform_indices = @transform_9, window_bounds = array<i64: 1, 64>}, {pipeline_mode = #tpu.pipeline_mode<synchronous>, transform_indices = @transform_10, window_bounds = array<i64: 64, 32>}, {pipeline_mode = #tpu.pipeline_mode<synchronous>, transform_indices = @transform_11, window_bounds = array<i64: 1, 32>}, {pipeline_mode = #tpu.pipeline_mode<synchronous>, transform_indices = @transform_12, window_bounds = array<i64: 1, 32>}, {pipeline_mode = #tpu.pipeline_mode<synchronous>, transform_indices = @transform_13, window_bounds = array<i64: 1, 32>}, {transform_indices = @transform_14, window_bounds = array<i64: 16, 32>}]} {
    %c0 = arith.constant 0 : index
    %c0_0 = arith.constant 0 : index
    %0 = vector.load %arg1[%c0, %c0_0] : memref<16x32xbf16, #tpu.memory_space<vmem>>, vector<16x32xbf16>
    %c0_1 = arith.constant 0 : index
    %c0_2 = arith.constant 0 : index
    %c0_3 = arith.constant 0 : index
    %1 = vector.load %arg2[%c0_1, %c0_2, %c0_3] : memref<4x1x8xf32, #tpu.memory_space<vmem>>, vector<4x1x8xf32>
    %c0_4 = arith.constant 0 : index
    %c0_5 = arith.constant 0 : index
    %2 = vector.load %arg3[%c0_4, %c0_5] : memref<32x96xbf16, #tpu.memory_space<vmem>>, vector<32x96xbf16>
    %cst = arith.constant dense<0.000000e+00> : vector<16x96xf32>
    %3 = tpu.matmul %0, %2, %cst {dimension_numbers = #tpu.dot_dimension_numbers<[1], [0], [0], [1], [0, 0, 1, 1], [], []>} : vector<16x32xbf16>, vector<32x96xbf16>, vector<16x96xf32> -> vector<16x96xf32>
    %c0_6 = arith.constant 0 : index
    %c0_7 = arith.constant 0 : index
    %4 = vector.load %arg4[%c0_6, %c0_7] : memref<1x96xf32, #tpu.memory_space<vmem>>, vector<1x96xf32>
    %5 = vector.broadcast %4 : vector<1x96xf32> to vector<16x96xf32>
    %6 = arith.addf %3, %5 : vector<16x96xf32>
    %7 = vector.extract_strided_slice %6 {offsets = [0, 0], sizes = [8, 16], strides = [1, 1]} : vector<16x96xf32> to vector<8x16xf32>
    %8 = vector.extract_strided_slice %6 {offsets = [0, 16], sizes = [8, 16], strides = [1, 1]} : vector<16x96xf32> to vector<8x16xf32>
    %9 = vector.extract_strided_slice %6 {offsets = [8, 0], sizes = [8, 16], strides = [1, 1]} : vector<16x96xf32> to vector<8x16xf32>
    %10 = vector.extract_strided_slice %6 {offsets = [8, 16], sizes = [8, 16], strides = [1, 1]} : vector<16x96xf32> to vector<8x16xf32>
    %11 = vector.shape_cast %7 : vector<8x16xf32> to vector<1x8x16xf32>
    %12 = vector.shape_cast %8 : vector<8x16xf32> to vector<1x8x16xf32>
    %13 = vector.shape_cast %9 : vector<8x16xf32> to vector<1x8x16xf32>
    %14 = vector.shape_cast %10 : vector<8x16xf32> to vector<1x8x16xf32>
    %15 = tpu.concatenate %11, %12, %13, %14 in 0 : vector<1x8x16xf32>, vector<1x8x16xf32>, vector<1x8x16xf32>, vector<1x8x16xf32> -> vector<4x8x16xf32>
    %16 = vector.extract_strided_slice %6 {offsets = [0, 32], sizes = [8, 16], strides = [1, 1]} : vector<16x96xf32> to vector<8x16xf32>
    %17 = vector.extract_strided_slice %6 {offsets = [0, 48], sizes = [8, 16], strides = [1, 1]} : vector<16x96xf32> to vector<8x16xf32>
    %18 = vector.extract_strided_slice %6 {offsets = [8, 32], sizes = [8, 16], strides = [1, 1]} : vector<16x96xf32> to vector<8x16xf32>
    %19 = vector.extract_strided_slice %6 {offsets = [8, 48], sizes = [8, 16], strides = [1, 1]} : vector<16x96xf32> to vector<8x16xf32>
    %20 = vector.shape_cast %16 : vector<8x16xf32> to vector<1x8x16xf32>
    %21 = vector.shape_cast %17 : vector<8x16xf32> to vector<1x8x16xf32>
    %22 = vector.shape_cast %18 : vector<8x16xf32> to vector<1x8x16xf32>
    %23 = vector.shape_cast %19 : vector<8x16xf32> to vector<1x8x16xf32>
    %24 = tpu.concatenate %20, %21, %22, %23 in 0 : vector<1x8x16xf32>, vector<1x8x16xf32>, vector<1x8x16xf32>, vector<1x8x16xf32> -> vector<4x8x16xf32>
    %25 = vector.extract_strided_slice %6 {offsets = [0, 64], sizes = [8, 16], strides = [1, 1]} : vector<16x96xf32> to vector<8x16xf32>
    %26 = vector.extract_strided_slice %6 {offsets = [0, 80], sizes = [8, 16], strides = [1, 1]} : vector<16x96xf32> to vector<8x16xf32>
    %27 = vector.extract_strided_slice %6 {offsets = [8, 64], sizes = [8, 16], strides = [1, 1]} : vector<16x96xf32> to vector<8x16xf32>
    %28 = vector.extract_strided_slice %6 {offsets = [8, 80], sizes = [8, 16], strides = [1, 1]} : vector<16x96xf32> to vector<8x16xf32>
    %29 = vector.shape_cast %25 : vector<8x16xf32> to vector<1x8x16xf32>
    %30 = vector.shape_cast %26 : vector<8x16xf32> to vector<1x8x16xf32>
    %31 = vector.shape_cast %27 : vector<8x16xf32> to vector<1x8x16xf32>
    %32 = vector.shape_cast %28 : vector<8x16xf32> to vector<1x8x16xf32>
    %33 = tpu.concatenate %29, %30, %31, %32 in 0 : vector<1x8x16xf32>, vector<1x8x16xf32>, vector<1x8x16xf32>, vector<1x8x16xf32> -> vector<4x8x16xf32>
    "tpu.trace_start"() <{level = 10 : i32, message = "gqd,gkd->gqk"}> : () -> ()
    %cst_8 = arith.constant dense<0.000000e+00> : vector<4x8x8xf32>
    %34 = tpu.matmul %15, %24, %cst_8 {dimension_numbers = #tpu.dot_dimension_numbers<[2], [2], [1], [1], [0, 0, 0, 1, 1, 1], [0], [0]>} : vector<4x8x16xf32>, vector<4x8x16xf32>, vector<4x8x8xf32> -> vector<4x8x8xf32>
    "tpu.trace_stop"() : () -> ()
    %cst_9 = arith.constant 2.500000e-01 : f32
    %35 = vector.broadcast %cst_9 : f32 to vector<4x8x8xf32>
    %36 = arith.mulf %34, %35 : vector<4x8x8xf32>
    %37 = vector.broadcast %1 : vector<4x1x8xf32> to vector<4x8x8xf32>
    %38 = arith.addf %36, %37 : vector<4x8x8xf32>
    %cst_10 = arith.constant dense<0xFF800000> : vector<4x8xf32>
    %39 = vector.multi_reduction <maximumf>, %38, %cst_10 [2] : vector<4x8x8xf32> to vector<4x8xf32>
    %40 = vector.shape_cast %39 : vector<4x8xf32> to vector<4x8x1xf32>
    %41 = vector.broadcast %40 : vector<4x8x1xf32> to vector<4x8x8xf32>
    %42 = arith.subf %38, %41 : vector<4x8x8xf32>
    %43 = math.exp %42 : vector<4x8x8xf32>
    %cst_11 = arith.constant dense<0.000000e+00> : vector<4x8xf32>
    %44 = vector.multi_reduction <add>, %43, %cst_11 [2] : vector<4x8x8xf32> to vector<4x8xf32>
    %45 = vector.shape_cast %44 : vector<4x8xf32> to vector<4x8x1xf32>
    %46 = tpu.reciprocal %45 {approx = true} : vector<4x8x1xf32> -> vector<4x8x1xf32>
    %47 = vector.broadcast %46 : vector<4x8x1xf32> to vector<4x8x8xf32>
    %48 = arith.mulf %43, %47 : vector<4x8x8xf32>
    "tpu.trace_start"() <{level = 10 : i32, message = "gqk,gkd->gqd"}> : () -> ()
    %cst_12 = arith.constant dense<0.000000e+00> : vector<4x8x16xf32>
    %49 = tpu.matmul %48, %33, %cst_12 {dimension_numbers = #tpu.dot_dimension_numbers<[2], [1], [1], [2], [0, 0, 0, 1, 1, 2], [0], [0]>} : vector<4x8x8xf32>, vector<4x8x16xf32>, vector<4x8x16xf32> -> vector<4x8x16xf32>
    "tpu.trace_stop"() : () -> ()
    %50 = vector.extract_strided_slice %49 {offsets = [0, 0, 0], sizes = [1, 8, 16], strides = [1, 1, 1]} : vector<4x8x16xf32> to vector<1x8x16xf32>
    %51 = vector.shape_cast %50 : vector<1x8x16xf32> to vector<8x16xf32>
    %52 = vector.extract_strided_slice %49 {offsets = [1, 0, 0], sizes = [1, 8, 16], strides = [1, 1, 1]} : vector<4x8x16xf32> to vector<1x8x16xf32>
    %53 = vector.shape_cast %52 : vector<1x8x16xf32> to vector<8x16xf32>
    %54 = tpu.concatenate %51, %53 in 1 : vector<8x16xf32>, vector<8x16xf32> -> vector<8x32xf32>
    %55 = vector.extract_strided_slice %49 {offsets = [2, 0, 0], sizes = [1, 8, 16], strides = [1, 1, 1]} : vector<4x8x16xf32> to vector<1x8x16xf32>
    %56 = vector.shape_cast %55 : vector<1x8x16xf32> to vector<8x16xf32>
    %57 = vector.extract_strided_slice %49 {offsets = [3, 0, 0], sizes = [1, 8, 16], strides = [1, 1, 1]} : vector<4x8x16xf32> to vector<1x8x16xf32>
    %58 = vector.shape_cast %57 : vector<1x8x16xf32> to vector<8x16xf32>
    %59 = tpu.concatenate %56, %58 in 1 : vector<8x16xf32>, vector<8x16xf32> -> vector<8x32xf32>
    %60 = tpu.concatenate %54, %59 in 0 : vector<8x32xf32>, vector<8x32xf32> -> vector<16x32xf32>
    %61 = arith.truncf %60 : vector<16x32xf32> to vector<16x32xbf16>
    %c0_13 = arith.constant 0 : index
    %c0_14 = arith.constant 0 : index
    %62 = vector.load %arg5[%c0_13, %c0_14] : memref<32x32xbf16, #tpu.memory_space<vmem>>, vector<32x32xbf16>
    %cst_15 = arith.constant dense<0.000000e+00> : vector<16x32xf32>
    %63 = tpu.matmul %61, %62, %cst_15 {dimension_numbers = #tpu.dot_dimension_numbers<[1], [0], [0], [1], [0, 0, 1, 1], [], []>} : vector<16x32xbf16>, vector<32x32xbf16>, vector<16x32xf32> -> vector<16x32xf32>
    %c0_16 = arith.constant 0 : index
    %c0_17 = arith.constant 0 : index
    %64 = vector.load %arg6[%c0_16, %c0_17] : memref<1x32xf32, #tpu.memory_space<vmem>>, vector<1x32xf32>
    %65 = vector.broadcast %64 : vector<1x32xf32> to vector<16x32xf32>
    %66 = arith.addf %63, %65 : vector<16x32xf32>
    %67 = arith.extf %0 : vector<16x32xbf16> to vector<16x32xf32>
    %68 = arith.addf %67, %66 : vector<16x32xf32>
    %c0_18 = arith.constant 0 : index
    %c0_19 = arith.constant 0 : index
    %69 = vector.load %arg7[%c0_18, %c0_19] : memref<1x32xf32, #tpu.memory_space<vmem>>, vector<1x32xf32>
    %c0_20 = arith.constant 0 : index
    %c0_21 = arith.constant 0 : index
    %70 = vector.load %arg8[%c0_20, %c0_21] : memref<1x32xf32, #tpu.memory_space<vmem>>, vector<1x32xf32>
    %cst_22 = arith.constant dense<0.000000e+00> : vector<16xf32>
    %71 = vector.multi_reduction <add>, %68, %cst_22 [1] : vector<16x32xf32> to vector<16xf32>
    %72 = vector.shape_cast %71 : vector<16xf32> to vector<16x1xf32>
    %cst_23 = arith.constant 3.200000e+01 : f32
    %73 = vector.broadcast %cst_23 : f32 to vector<16x1xf32>
    %74 = arith.divf %72, %73 : vector<16x1xf32>
    %75 = vector.broadcast %74 : vector<16x1xf32> to vector<16x32xf32>
    %76 = arith.subf %68, %75 : vector<16x32xf32>
    %77 = arith.mulf %76, %76 : vector<16x32xf32>
    %cst_24 = arith.constant dense<0.000000e+00> : vector<16xf32>
    %78 = vector.multi_reduction <add>, %77, %cst_24 [1] : vector<16x32xf32> to vector<16xf32>
    %79 = vector.shape_cast %78 : vector<16xf32> to vector<16x1xf32>
    %cst_25 = arith.constant 3.200000e+01 : f32
    %80 = vector.broadcast %cst_25 : f32 to vector<16x1xf32>
    %81 = arith.divf %79, %80 : vector<16x1xf32>
    %82 = vector.broadcast %74 : vector<16x1xf32> to vector<16x32xf32>
    %83 = arith.subf %68, %82 : vector<16x32xf32>
    %cst_26 = arith.constant 9.99999996E-13 : f32
    %84 = vector.broadcast %cst_26 : f32 to vector<16x1xf32>
    %85 = arith.addf %81, %84 : vector<16x1xf32>
    %86 = math.rsqrt %85 : vector<16x1xf32>
    %87 = vector.broadcast %86 : vector<16x1xf32> to vector<16x32xf32>
    %88 = arith.mulf %83, %87 : vector<16x32xf32>
    %89 = vector.broadcast %69 : vector<1x32xf32> to vector<16x32xf32>
    %90 = arith.mulf %88, %89 : vector<16x32xf32>
    %91 = vector.broadcast %70 : vector<1x32xf32> to vector<16x32xf32>
    %92 = arith.addf %90, %91 : vector<16x32xf32>
    %93 = arith.truncf %92 : vector<16x32xf32> to vector<16x32xbf16>
    %c0_27 = arith.constant 0 : index
    %c0_28 = arith.constant 0 : index
    %94 = vector.load %arg9[%c0_27, %c0_28] : memref<32x64xbf16, #tpu.memory_space<vmem>>, vector<32x64xbf16>
    %cst_29 = arith.constant dense<0.000000e+00> : vector<16x64xf32>
    %95 = tpu.matmul %93, %94, %cst_29 {dimension_numbers = #tpu.dot_dimension_numbers<[1], [0], [0], [1], [0, 0, 1, 1], [], []>} : vector<16x32xbf16>, vector<32x64xbf16>, vector<16x64xf32> -> vector<16x64xf32>
    %c0_30 = arith.constant 0 : index
    %c0_31 = arith.constant 0 : index
    %96 = vector.load %arg10[%c0_30, %c0_31] : memref<1x64xf32, #tpu.memory_space<vmem>>, vector<1x64xf32>
    %97 = vector.broadcast %96 : vector<1x64xf32> to vector<16x64xf32>
    %98 = arith.addf %95, %97 : vector<16x64xf32>
    %cst_32 = arith.constant 5.000000e-01 : f32
    %99 = vector.broadcast %cst_32 : f32 to vector<16x64xf32>
    %100 = arith.mulf %99, %98 : vector<16x64xf32>
    %cst_33 = arith.constant 4.471500e-02 : f32
    %101 = vector.broadcast %cst_33 : f32 to vector<16x64xf32>
    %102 = arith.mulf %101, %98 : vector<16x64xf32>
    %103 = arith.mulf %102, %98 : vector<16x64xf32>
    %104 = arith.mulf %103, %98 : vector<16x64xf32>
    %105 = arith.addf %98, %104 : vector<16x64xf32>
    %cst_34 = arith.constant 0.797884583 : f32
    %106 = vector.broadcast %cst_34 : f32 to vector<16x64xf32>
    %107 = arith.mulf %106, %105 : vector<16x64xf32>
    %108 = math.tanh %107 : vector<16x64xf32>
    %cst_35 = arith.constant 1.000000e+00 : f32
    %109 = vector.broadcast %cst_35 : f32 to vector<16x64xf32>
    %110 = arith.addf %109, %108 : vector<16x64xf32>
    %111 = arith.mulf %100, %110 : vector<16x64xf32>
    %112 = arith.truncf %111 : vector<16x64xf32> to vector<16x64xbf16>
    %c0_36 = arith.constant 0 : index
    %c0_37 = arith.constant 0 : index
    %113 = vector.load %arg11[%c0_36, %c0_37] : memref<64x32xbf16, #tpu.memory_space<vmem>>, vector<64x32xbf16>
    %cst_38 = arith.constant dense<0.000000e+00> : vector<16x32xf32>
    %114 = tpu.matmul %112, %113, %cst_38 {dimension_numbers = #tpu.dot_dimension_numbers<[1], [0], [0], [1], [0, 0, 1, 1], [], []>} : vector<16x64xbf16>, vector<64x32xbf16>, vector<16x32xf32> -> vector<16x32xf32>
    %c0_39 = arith.constant 0 : index
    %c0_40 = arith.constant 0 : index
    %115 = vector.load %arg12[%c0_39, %c0_40] : memref<1x32xf32, #tpu.memory_space<vmem>>, vector<1x32xf32>
    %116 = vector.broadcast %115 : vector<1x32xf32> to vector<16x32xf32>
    %117 = arith.addf %114, %116 : vector<16x32xf32>
    %118 = arith.addf %92, %117 : vector<16x32xf32>
    %c0_41 = arith.constant 0 : index
    %c0_42 = arith.constant 0 : index
    %119 = vector.load %arg13[%c0_41, %c0_42] : memref<1x32xf32, #tpu.memory_space<vmem>>, vector<1x32xf32>
    %c0_43 = arith.constant 0 : index
    %c0_44 = arith.constant 0 : index
    %120 = vector.load %arg14[%c0_43, %c0_44] : memref<1x32xf32, #tpu.memory_space<vmem>>, vector<1x32xf32>
    %cst_45 = arith.constant dense<0.000000e+00> : vector<16xf32>
    %121 = vector.multi_reduction <add>, %118, %cst_45 [1] : vector<16x32xf32> to vector<16xf32>
    %122 = vector.shape_cast %121 : vector<16xf32> to vector<16x1xf32>
    %cst_46 = arith.constant 3.200000e+01 : f32
    %123 = vector.broadcast %cst_46 : f32 to vector<16x1xf32>
    %124 = arith.divf %122, %123 : vector<16x1xf32>
    %125 = vector.broadcast %124 : vector<16x1xf32> to vector<16x32xf32>
    %126 = arith.subf %118, %125 : vector<16x32xf32>
    %127 = arith.mulf %126, %126 : vector<16x32xf32>
    %cst_47 = arith.constant dense<0.000000e+00> : vector<16xf32>
    %128 = vector.multi_reduction <add>, %127, %cst_47 [1] : vector<16x32xf32> to vector<16xf32>
    %129 = vector.shape_cast %128 : vector<16xf32> to vector<16x1xf32>
    %cst_48 = arith.constant 3.200000e+01 : f32
    %130 = vector.broadcast %cst_48 : f32 to vector<16x1xf32>
    %131 = arith.divf %129, %130 : vector<16x1xf32>
    %132 = vector.broadcast %124 : vector<16x1xf32> to vector<16x32xf32>
    %133 = arith.subf %118, %132 : vector<16x32xf32>
    %cst_49 = arith.constant 9.99999996E-13 : f32
    %134 = vector.broadcast %cst_49 : f32 to vector<16x1xf32>
    %135 = arith.addf %131, %134 : vector<16x1xf32>
    %136 = math.rsqrt %135 : vector<16x1xf32>
    %137 = vector.broadcast %136 : vector<16x1xf32> to vector<16x32xf32>
    %138 = arith.mulf %133, %137 : vector<16x32xf32>
    %139 = vector.broadcast %119 : vector<1x32xf32> to vector<16x32xf32>
    %140 = arith.mulf %138, %139 : vector<16x32xf32>
    %141 = vector.broadcast %120 : vector<1x32xf32> to vector<16x32xf32>
    %142 = arith.addf %140, %141 : vector<16x32xf32>
    %143 = arith.truncf %142 : vector<16x32xf32> to vector<16x32xbf16>
    %c0_50 = arith.constant 0 : index
    %c0_51 = arith.constant 0 : index
    %144 = vector.load %arg15[%c0_50, %c0_51] : memref<16x32xbf16, #tpu.memory_space<vmem>>, vector<16x32xbf16>
    tpu.vector_store %arg15[%c0_50, %c0_51], %143 {strides = array<i32>} : memref<16x32xbf16, #tpu.memory_space<vmem>>, vector<16x32xbf16>,
    return
  }
  func.func @transform_0(%arg0: i32) -> (i32, i32) {
    %c0_i32 = arith.constant 0 : i32
    %c0_i32_0 = arith.constant 0 : i32
    return %arg0, %c0_i32 : i32, i32
  }
  func.func @transform_1(%arg0: i32) -> (i32, i32, i32) {
    %c0_i32 = arith.constant 0 : i32
    %c0_i32_0 = arith.constant 0 : i32
    %c0_i32_1 = arith.constant 0 : i32
    return %arg0, %c0_i32, %c0_i32_0 : i32, i32, i32
  }
  func.func @transform_2(%arg0: i32) -> (i32, i32) {
    %c0_i32 = arith.constant 0 : i32
    %c0_i32_0 = arith.constant 0 : i32
    %c0_i32_1 = arith.constant 0 : i32
    return %c0_i32, %c0_i32_0 : i32, i32
  }
  func.func @transform_3(%arg0: i32) -> (i32, i32) {
    %c0_i32 = arith.constant 0 : i32
    %c0_i32_0 = arith.constant 0 : i32
    %c0_i32_1 = arith.constant 0 : i32
    return %c0_i32, %c0_i32_0 : i32, i32
  }
  func.func @transform_4(%arg0: i32) -> (i32, i32) {
    %c0_i32 = arith.constant 0 : i32
    %c0_i32_0 = arith.constant 0 : i32
    %c0_i32_1 = arith.constant 0 : i32
    return %c0_i32, %c0_i32_0 : i32, i32
  }
  func.func @transform_5(%arg0: i32) -> (i32, i32) {
    %c0_i32 = arith.constant 0 : i32
    %c0_i32_0 = arith.constant 0 : i32
    %c0_i32_1 = arith.constant 0 : i32
    return %c0_i32, %c0_i32_0 : i32, i32
  }
  func.func @transform_6(%arg0: i32) -> (i32, i32) {
    %c0_i32 = arith.constant 0 : i32
    %c0_i32_0 = arith.constant 0 : i32
    %c0_i32_1 = arith.constant 0 : i32
    return %c0_i32, %c0_i32_0 : i32, i32
  }
  func.func @transform_7(%arg0: i32) -> (i32, i32) {
    %c0_i32 = arith.constant 0 : i32
    %c0_i32_0 = arith.constant 0 : i32
    %c0_i32_1 = arith.constant 0 : i32
    return %c0_i32, %c0_i32_0 : i32, i32
  }
  func.func @transform_8(%arg0: i32) -> (i32, i32) {
    %c0_i32 = arith.constant 0 : i32
    %c0_i32_0 = arith.constant 0 : i32
    %c0_i32_1 = arith.constant 0 : i32
    return %c0_i32, %c0_i32_0 : i32, i32
  }
  func.func @transform_9(%arg0: i32) -> (i32, i32) {
    %c0_i32 = arith.constant 0 : i32
    %c0_i32_0 = arith.constant 0 : i32
    %c0_i32_1 = arith.constant 0 : i32
    return %c0_i32, %c0_i32_0 : i32, i32
  }
  func.func @transform_10(%arg0: i32) -> (i32, i32) {
    %c0_i32 = arith.constant 0 : i32
    %c0_i32_0 = arith.constant 0 : i32
    %c0_i32_1 = arith.constant 0 : i32
    return %c0_i32, %c0_i32_0 : i32, i32
  }
  func.func @transform_11(%arg0: i32) -> (i32, i32) {
    %c0_i32 = arith.constant 0 : i32
    %c0_i32_0 = arith.constant 0 : i32
    %c0_i32_1 = arith.constant 0 : i32
    return %c0_i32, %c0_i32_0 : i32, i32
  }
  func.func @transform_12(%arg0: i32) -> (i32, i32) {
    %c0_i32 = arith.constant 0 : i32
    %c0_i32_0 = arith.constant 0 : i32
    %c0_i32_1 = arith.constant 0 : i32
    return %c0_i32, %c0_i32_0 : i32, i32
  }
  func.func @transform_13(%arg0: i32) -> (i32, i32) {
    %c0_i32 = arith.constant 0 : i32
    %c0_i32_0 = arith.constant 0 : i32
    %c0_i32_1 = arith.constant 0 : i32
    return %c0_i32, %c0_i32_0 : i32, i32
  }
  func.func @transform_14(%arg0: i32) -> (i32, i32) {
    %c0_i32 = arith.constant 0 : i32
    %c0_i32_0 = arith.constant 0 : i32
    return %arg0, %c0_i32 : i32, i32
  }
}

</mosaic_0001>

<llo_original>
// kernel: bert_forward.3
$region0: #{bert_forward.3}
  #allocation0 [shape = 'u32[]', space=smem, size = 0x4, offset = 0x4, fixed_abs, tag = 'smem constant byte address 0x4 - core index']
  #allocation1 [shape = 'u32[144,128]{1,0:T(1,128)}', space=vmem, size = 0x12000, scoped, tag = 'internal scratch']
  %s0 = inlined_call_operand.vmem [shape: f32[16,32], index: 0, kind: input, shape index: {}]
  %s1 = inlined_call_operand.vmem [shape: f32[1,32], index: 1, kind: input, shape index: {}]
  %s2 = inlined_call_operand.vmem [shape: f32[1,32], index: 2, kind: input, shape index: {}]
  %s3 = inlined_call_operand.vmem [shape: bf16[16,32], index: 3, kind: output, shape index: {}]
  %s4 = sld [smem:[#allocation0]]
  $region22: #{bert_forward.3} parent=0
    _
  %s6 = ssub.s32 1, %s4
  %s7 = scalar_select 0, %s6, %s4
  // Predicated region
  $region2: #{bert_forward.3} parent=0 // pred_check
    _
  $region3: #{bert_forward.3} parent=0 // pred_check_branch
    %9 = sbr.rel (0) target = $region5
  $region4: #{bert_forward.3} parent=0 // pred_region
    _
  $region5: #{bert_forward.3} parent=0 // pred_fallthru
    _
  // Predicated region
  $region6: #{bert_forward.3} parent=0 // pred_check
    _
  $region7: #{bert_forward.3} parent=0 // pred_check_branch
    %11 = sbr.rel (0) target = $region9
  $region8: #{bert_forward.3} parent=0 // pred_region
    _
  $region9: #{bert_forward.3} parent=0 // pred_fallthru
    _
  // Predicated region
  $region10: #{bert_forward.3} parent=0 // pred_check
    _
  $region11: #{bert_forward.3} parent=0 // pred_check_branch
    %13 = sbr.rel (0) target = $region13
  $region12: #{bert_forward.3} parent=0 // pred_region
    _
  $region13: #{bert_forward.3} parent=0 // pred_fallthru
    _
  %v14 = vld [vmem:[%s0] sm:$0xff]
  %v15 = vld [vmem:[%s0 + $0x8] sm:$0xff]
  %v16 = vld [vmem:[%s1] sm:$0x1]
  %v17 = vld [vmem:[%s2] sm:$0x1]
  %vm18 = vcmask 261120
  %v19 = vsel %vm18, %v14, 0.0
  %20 = vadd.xlane.f32.xlu0 %v19
  %v21 = vpop.xlane.xlu0 %20
  %v22 = vsel %vm18, %v15, 0.0
  %23 = vadd.xlane.f32.xlu0 %v22
  %v24 = vpop.xlane.xlu0 %23
  %v25 = vrcp.pop 32.0
  %v26 = vmul.f32 %v21, %v25
  %v27 = vmul.f32 %v24, %v25
  %v28 = vsub.f32 %v14, %v26
  %v29 = vsub.f32 %v15, %v27
  %v30 = vmul.f32 %v28, %v28
  %v31 = vmul.f32 %v29, %v29
  %v32 = vsel %vm18, %v30, 0.0
  %33 = vadd.xlane.f32.xlu0 %v32
  %v34 = vpop.xlane.xlu0 %33
  %v35 = vsel %vm18, %v31, 0.0
  %36 = vadd.xlane.f32.xlu0 %v35
  %v37 = vpop.xlane.xlu0 %36
  %v38 = vmul.f32 %v34, %v25
  %v39 = vmul.f32 %v37, %v25
  %v40 = vadd.f32 %v38, 1e-12
  %v41 = vadd.f32 %v39, 1e-12
  %v42 = vrsqrt.pop %v40
  %v43 = vrsqrt.pop %v41
  %v44 = vmul.f32 %v28, %v42
  %v45 = vmul.f32 %v29, %v43
  %v47 = vlaneseq
  %v48 = vshrl.u32 %v47, 7
  %v49 = vsub.s32 0, %v48
  %v50 = vrot.slane %v16, %v49
  %v52 = vmul.f32 %v44, %v50
  %v53 = vmul.f32 %v45, %v50
  %v55 = vlaneseq
  %v56 = vshrl.u32 %v55, 7
  %v57 = vsub.s32 0, %v56
  %v58 = vrot.slane %v17, %v57
  %v60 = vadd.f32 %v52, %v58
  %v61 = vadd.f32 %v53, %v58
  %v62 = vpack.c.bf16 %v61, %v60
  %v64 = vunpack.c.l.b16 %v62
  %v65 = vunpack.c.h.b16 %v62
  %v66 = vpack.c.b16 %v64, %v64
  %v67 = vpack.c.b16 %v65, %v65
  %vm70 = vcmask 257024
  %71 = vst.msk [vmem:[%s3] sm:$0xf] %vm70, %v66
  %72 = vst.msk [vmem:[%s3 + $0x4] sm:$0xf] %vm70, %v67
  // Predicated region
  $region14: #{bert_forward.3} parent=0 // pred_check
    _
  $region15: #{bert_forward.3} parent=0 // pred_check_branch
    %74 = sbr.rel (0) target = $region17
  $region16: #{bert_forward.3} parent=0 // pred_region
    _
  $region17: #{bert_forward.3} parent=0 // pred_fallthru
    _
  // Predicated region
  $region18: #{bert_forward.3} parent=0 // pred_check
    _
  $region19: #{bert_forward.3} parent=0 // pred_check_branch
    %76 = sbr.rel (0) target = $region21
  $region20: #{bert_forward.3} parent=0 // pred_region
    _
  $region21: #{bert_forward.3} parent=0 // pred_fallthru
    _

// kernel: bert_forward.4
$region0: #{bert_forward.4}
  #allocation0 [shape = 'u32[]', space=smem, size = 0x4, offset = 0x4, fixed_abs, tag = 'smem constant byte address 0x4 - core index']
  #allocation1 [shape = 'u32[144,128]{1,0:T(1,128)}', space=vmem, size = 0x12000, scoped, tag = 'internal scratch']
  %s0 = inlined_call_operand.vmem [shape: bf16[16,32], index: 0, kind: input, shape index: {}]
  %s1 = inlined_call_operand.vmem [shape: f32[4,1,8], index: 1, kind: input, shape index: {}]
  %s2 = inlined_call_operand.vmem [shape: bf16[32,96], index: 2, kind: input, shape index: {}]
  %s3 = inlined_call_operand.vmem [shape: f32[1,96], index: 3, kind: input, shape index: {}]
  %s4 = inlined_call_operand.vmem [shape: bf16[32,32], index: 4, kind: input, shape index: {}]
  %s5 = inlined_call_operand.vmem [shape: f32[1,32], index: 5, kind: input, shape index: {}]
  %s6 = inlined_call_operand.vmem [shape: f32[1,32], index: 6, kind: input, shape index: {}]
  %s7 = inlined_call_operand.vmem [shape: f32[1,32], index: 7, kind: input, shape index: {}]
  %s8 = inlined_call_operand.vmem [shape: bf16[32,64], index: 8, kind: input, shape index: {}]
  %s9 = inlined_call_operand.vmem [shape: f32[1,64], index: 9, kind: input, shape index: {}]
  %s10 = inlined_call_operand.vmem [shape: bf16[64,32], index: 10, kind: input, shape index: {}]
  %s11 = inlined_call_operand.vmem [shape: f32[1,32], index: 11, kind: input, shape index: {}]
  %s12 = inlined_call_operand.vmem [shape: f32[1,32], index: 12, kind: input, shape index: {}]
  %s13 = inlined_call_operand.vmem [shape: f32[1,32], index: 13, kind: input, shape index: {}]
  %s14 = inlined_call_operand.vmem [shape: bf16[16,32], index: 14, kind: output, shape index: {}]
  %s15 = sld [smem:[#allocation0]]
  $region66: #{bert_forward.4} parent=0
    _
  %s17 = ssub.s32 1, %s15
  %s18 = scalar_select 0, %s17, %s15
  // Predicated region
  $region2: #{bert_forward.4} parent=0 // pred_check
    _
  $region3: #{bert_forward.4} parent=0 // pred_check_branch
    %20 = sbr.rel (0) target = $region5
  $region4: #{bert_forward.4} parent=0 // pred_region
    _
  $region5: #{bert_forward.4} parent=0 // pred_fallthru
    _
  // Predicated region
  $region6: #{bert_forward.4} parent=0 // pred_check
    _
  $region7: #{bert_forward.4} parent=0 // pred_check_branch
    %22 = sbr.rel (0) target = $region9
  $region8: #{bert_forward.4} parent=0 // pred_region
    _
  $region9: #{bert_forward.4} parent=0 // pred_fallthru
    _
  // Predicated region
  $region10: #{bert_forward.4} parent=0 // pred_check
    _
  $region11: #{bert_forward.4} parent=0 // pred_check_branch
    %24 = sbr.rel (0) target = $region13
  $region12: #{bert_forward.4} parent=0 // pred_region
    _
  $region13: #{bert_forward.4} parent=0 // pred_fallthru
    _
  // Predicated region
  $region14: #{bert_forward.4} parent=0 // pred_check
    _
  $region15: #{bert_forward.4} parent=0 // pred_check_branch
    %26 = sbr.rel (0) target = $region17
  $region16: #{bert_forward.4} parent=0 // pred_region
    _
  $region17: #{bert_forward.4} parent=0 // pred_fallthru
    _
  // Predicated region
  $region18: #{bert_forward.4} parent=0 // pred_check
    _
  $region19: #{bert_forward.4} parent=0 // pred_check_branch
    %28 = sbr.rel (0) target = $region21
  $region20: #{bert_forward.4} parent=0 // pred_region
    _
  $region21: #{bert_forward.4} parent=0 // pred_fallthru
    _
  // Predicated region
  $region22: #{bert_forward.4} parent=0 // pred_check
    _
  $region23: #{bert_forward.4} parent=0 // pred_check_branch
    %30 = sbr.rel (0) target = $region25
  $region24: #{bert_forward.4} parent=0 // pred_region
    _
  $region25: #{bert_forward.4} parent=0 // pred_fallthru
    _
  // Predicated region
  $region26: #{bert_forward.4} parent=0 // pred_check
    _
  $region27: #{bert_forward.4} parent=0 // pred_check_branch
    %32 = sbr.rel (0) target = $region29
  $region28: #{bert_forward.4} parent=0 // pred_region
    _
  $region29: #{bert_forward.4} parent=0 // pred_fallthru
    _
  // Predicated region
  $region30: #{bert_forward.4} parent=0 // pred_check
    _
  $region31: #{bert_forward.4} parent=0 // pred_check_branch
    %34 = sbr.rel (0) target = $region33
  $region32: #{bert_forward.4} parent=0 // pred_region
    _
  $region33: #{bert_forward.4} parent=0 // pred_fallthru
    _
  // Predicated region
  $region34: #{bert_forward.4} parent=0 // pred_check
    _
  $region35: #{bert_forward.4} parent=0 // pred_check_branch
    %36 = sbr.rel (0) target = $region37
  $region36: #{bert_forward.4} parent=0 // pred_region
    _
  $region37: #{bert_forward.4} parent=0 // pred_fallthru
    _
  // Predicated region
  $region38: #{bert_forward.4} parent=0 // pred_check
    _
  $region39: #{bert_forward.4} parent=0 // pred_check_branch
    %38 = sbr.rel (0) target = $region41
  $region40: #{bert_forward.4} parent=0 // pred_region
    _
  $region41: #{bert_forward.4} parent=0 // pred_fallthru
    _
  // Predicated region
  $region42: #{bert_forward.4} parent=0 // pred_check
    _
  $region43: #{bert_forward.4} parent=0 // pred_check_branch
    %40 = sbr.rel (0) target = $region45
  $region44: #{bert_forward.4} parent=0 // pred_region
    _
  $region45: #{bert_forward.4} parent=0 // pred_fallthru
    _
  // Predicated region
  $region46: #{bert_forward.4} parent=0 // pred_check
    _
  $region47: #{bert_forward.4} parent=0 // pred_check_branch
    %42 = sbr.rel (0) target = $region49
  $region48: #{bert_forward.4} parent=0 // pred_region
    _
  $region49: #{bert_forward.4} parent=0 // pred_fallthru
    _
  // Predicated region
  $region50: #{bert_forward.4} parent=0 // pred_check
    _
  $region51: #{bert_forward.4} parent=0 // pred_check_branch
    %44 = sbr.rel (0) target = $region53
  $region52: #{bert_forward.4} parent=0 // pred_region
    _
  $region53: #{bert_forward.4} parent=0 // pred_fallthru
    _
  // Predicated region
  $region54: #{bert_forward.4} parent=0 // pred_check
    _
  $region55: #{bert_forward.4} parent=0 // pred_check_branch
    %46 = sbr.rel (0) target = $region57
  $region56: #{bert_forward.4} parent=0 // pred_region
    _
  $region57: #{bert_forward.4} parent=0 // pred_fallthru
    _
  %v48 = vld [vmem:[%s0] sm:$0xf]
  %v49 = vld [vmem:[%s0 + $0x4] sm:$0xf]
  %v50 = vld [vmem:[%s1] sm:$0x1]
  %v51 = vld [vmem:[%s1 + $0x1] sm:$0x1]
  %v52 = vld [vmem:[%s1 + $0x2] sm:$0x1]
  %v53 = vld [vmem:[%s1 + $0x3] sm:$0x1]
  %v54 = vld [vmem:[%s2] sm:$0xf]
  %v55 = vld [vmem:[%s2 + $0x4] sm:$0xf]
  %v56 = vld [vmem:[%s2 + $0x8] sm:$0xf]
  %v57 = vld [vmem:[%s2 + $0xc] sm:$0xf]
  %v58 = vld [vmem:[%s3] sm:$0x1]
  %v60 = vlaneseq
  %v61 = vshrl.u32 %v60, 7
  %v62 = vsub.s32 0, %v61
  %v63 = vrot.slane %v58, %v62
  %v67 = vunpack.c.l.b16 %v48
  %v68 = vunpack.c.l.b16 %v49
  %v69 = vpack.c.b16 %v68, %v67
  %v74 = vunpack.c.l.b16 %v54
  %v75 = vunpack.c.l.b16 %v55
  %v76 = vunpack.c.l.b16 %v56
  %v77 = vunpack.c.l.b16 %v57
  %v78 = vpack.c.b16 %v75, %v74
  %v79 = vpack.c.b16 %v77, %v76
  %vm82 = vcmask 261120
  %v84 = vsel %vm82, %v69, 0
  %86 = vmatprep.subr.bf16.mxu0 0
  %87 = vmatpush1.bf16.msra.mxu0 %v78
  %88 = vmatprep.subr.bf16.mxu0 0
  %89 = vmatpush1.bf16.msra.mxu0 %v79
  %90 = vmatprep.subr.bf16.mxu0 0
  %91 = vmatpush1.bf16.msra.mxu0 0
  %92 = vmatprep.subr.bf16.mxu0 0
  %93 = vmatpush1.bf16.msra.mxu0 0
  %94 = vmatprep.subr.bf16.mxu0 0
  %95 = vmatpush1.bf16.msra.mxu0 0
  %96 = vmatprep.subr.bf16.mxu0 0
  %97 = vmatpush1.bf16.msra.mxu0 0
  %98 = vmatprep.subr.bf16.mxu0 0
  %99 = vmatpush1.bf16.msra.mxu0 0
  %100 = vmatprep.subr.bf16.mxu0 0
  %101 = vmatpush1.bf16.msra.mxu0 0
  %102 = vmatprep.subr.bf16.mxu0 0
  %103 = vmatpush1.bf16.msra.mxu0 0
  %104 = vmatprep.subr.bf16.mxu0 0
  %105 = vmatpush1.bf16.msra.mxu0 0
  %106 = vmatprep.subr.bf16.mxu0 0
  %107 = vmatpush1.bf16.msra.mxu0 0
  %108 = vmatprep.subr.bf16.mxu0 0
  %109 = vmatpush1.bf16.msra.mxu0 0
  %110 = vmatprep.subr.bf16.mxu0 0
  %111 = vmatpush1.bf16.msra.mxu0 0
  %112 = vmatprep.subr.bf16.mxu0 0
  %113 = vmatpush1.bf16.msra.mxu0 0
  %114 = vmatprep.subr.bf16.mxu0 0
  %115 = vmatpush1.bf16.msra.mxu0 0
  %116 = vmatprep.subr.bf16.mxu0 0
  %117 = vmatpush1.bf16.msra.mxu0 0
  %118 = vmatprep.mubr.bf16.mxu0 0
  %119 = vmatmul.mubr.bf16.gmra.mrb[0].mxu0 %v84
  %v120 = vpop.f32.mrb[0].mxu0
  %v121 = vadd.f32 %v63, %v120
  %v122 = vpop.f32.mrb[0].mxu0
  %v123 = vpop.f32.mrb[0].mxu0
  %v124 = vadd.f32 %v63, %v123
  %v125 = vpop.f32.mrb[0].mxu0
  %126 = vdwg.mxu0
  %128 = vrot.lane.b32.xlu0 %v121, 112
  %v129 = vpop.permute.xlu0 %128
  %131 = vrot.lane.b32.xlu0 %v124, 112
  %v132 = vpop.permute.xlu0 %131
  %133 = vrot.lane.b32.xlu0 %v121, 96
  %v134 = vpop.permute.xlu0 %133
  %vm135 = vcmask 130048
  %v136 = vsel %vm135, %v121, 0
  %v138 = vsel %vm135, %v134, 0
  %140 = vmatprep.subr.mxu0 0.0
  %141 = vmatpush1.xpose.msra.mxu0 %v138
  %142 = vmatprep.subr.mxu0 0.0
  %143 = vmatpush1.xpose.msra.mxu0 0.0
  %144 = vmatprep.subr.mxu0 0.0
  %145 = vmatpush1.xpose.msra.mxu0 0.0
  %146 = vmatprep.subr.mxu0 0.0
  %147 = vmatpush1.xpose.msra.mxu0 0.0
  %148 = vmatprep.subr.mxu0 0.0
  %149 = vmatpush1.xpose.msra.mxu0 0.0
  %150 = vmatprep.subr.mxu0 0.0
  %151 = vmatpush1.xpose.msra.mxu0 0.0
  %152 = vmatprep.subr.mxu0 0.0
  %153 = vmatpush1.xpose.msra.mxu0 0.0
  %154 = vmatprep.subr.mxu0 0.0
  %155 = vmatpush1.xpose.msra.mxu0 0.0
  %156 = vmatprep.subr.mxu0 0.0
  %157 = vmatpush1.xpose.msra.mxu0 0.0
  %158 = vmatprep.subr.mxu0 0.0
  %159 = vmatpush1.xpose.msra.mxu0 0.0
  %160 = vmatprep.subr.mxu0 0.0
  %161 = vmatpush1.xpose.msra.mxu0 0.0
  %162 = vmatprep.subr.mxu0 0.0
  %163 = vmatpush1.xpose.msra.mxu0 0.0
  %164 = vmatprep.subr.mxu0 0.0
  %165 = vmatpush1.xpose.msra.mxu0 0.0
  %166 = vmatprep.subr.mxu0 0.0
  %167 = vmatpush1.xpose.msra.mxu0 0.0
  %168 = vmatprep.subr.mxu0 0.0
  %169 = vmatpush1.xpose.msra.mxu0 0.0
  %170 = vmatprep.subr.mxu0 0.0
  %171 = vmatpush1.xpose.msra.mxu0 0.0
  %172 = vmatprep.subr.mxu0 0.0
  %173 = vmatpush1.xpose.msra.mxu0 0.0
  %174 = vmatprep.subr.mxu0 0.0
  %175 = vmatpush1.xpose.msra.mxu0 0.0
  %176 = vmatprep.subr.mxu0 0.0
  %177 = vmatpush1.xpose.msra.mxu0 0.0
  %178 = vmatprep.subr.mxu0 0.0
  %179 = vmatpush1.xpose.msra.mxu0 0.0
  %180 = vmatprep.subr.mxu0 0.0
  %181 = vmatpush1.xpose.msra.mxu0 0.0
  %182 = vmatprep.subr.mxu0 0.0
  %183 = vmatpush1.xpose.msra.mxu0 0.0
  %184 = vmatprep.subr.mxu0 0.0
  %185 = vmatpush1.xpose.msra.mxu0 0.0
  %186 = vmatprep.subr.mxu0 0.0
  %187 = vmatpush1.xpose.msra.mxu0 0.0
  %188 = vmatprep.subr.mxu0 0.0
  %189 = vmatpush1.xpose.msra.mxu0 0.0
  %190 = vmatprep.subr.mxu0 0.0
  %191 = vmatpush1.xpose.msra.mxu0 0.0
  %192 = vmatprep.subr.mxu0 0.0
  %193 = vmatpush1.xpose.msra.mxu0 0.0
  %194 = vmatprep.subr.mxu0 0.0
  %195 = vmatpush1.xpose.msra.mxu0 0.0
  %196 = vmatprep.subr.mxu0 0.0
  %197 = vmatpush1.xpose.msra.mxu0 0.0
  %198 = vmatprep.subr.mxu0 0.0
  %199 = vmatpush1.xpose.msra.mxu0 0.0
  %200 = vmatprep.subr.mxu0 0.0
  %201 = vmatpush1.xpose.msra.mxu0 0.0
  %202 = vmatprep.subr.mxu0 0.0
  %203 = vmatpush1.xpose.msra.mxu0 0.0
  %204 = vmatprep.mubr.f32.mxu0 0.0
  %205 = vmatmul.mubr.f32.gmra.mrb[0].mxu0 %v136
  %v206 = vpop.f32.mrb[0].mxu0
  %v207 = vadd.f32 0.0, %v206
  %v208 = vpop.f32.mrb[0].mxu0
  %209 = vdwg.mxu0
  %210 = vrot.lane.b32.xlu0 %v129, 96
  %v211 = vpop.permute.xlu0 %210
  %v212 = vsel %vm135, %v129, 0
  %v214 = vsel %vm135, %v211, 0
  %216 = vmatprep.subr.mxu0 0.0
  %217 = vmatpush1.xpose.msra.mxu0 %v214
  %218 = vmatprep.subr.mxu0 0.0
  %219 = vmatpush1.xpose.msra.mxu0 0.0
  %220 = vmatprep.subr.mxu0 0.0
  %221 = vmatpush1.xpose.msra.mxu0 0.0
  %222 = vmatprep.subr.mxu0 0.0
  %223 = vmatpush1.xpose.msra.mxu0 0.0
  %224 = vmatprep.subr.mxu0 0.0
  %225 = vmatpush1.xpose.msra.mxu0 0.0
  %226 = vmatprep.subr.mxu0 0.0
  %227 = vmatpush1.xpose.msra.mxu0 0.0
  %228 = vmatprep.subr.mxu0 0.0
  %229 = vmatpush1.xpose.msra.mxu0 0.0
  %230 = vmatprep.subr.mxu0 0.0
  %231 = vmatpush1.xpose.msra.mxu0 0.0
  %232 = vmatprep.subr.mxu0 0.0
  %233 = vmatpush1.xpose.msra.mxu0 0.0
  %234 = vmatprep.subr.mxu0 0.0
  %235 = vmatpush1.xpose.msra.mxu0 0.0
  %236 = vmatprep.subr.mxu0 0.0
  %237 = vmatpush1.xpose.msra.mxu0 0.0
  %238 = vmatprep.subr.mxu0 0.0
  %239 = vmatpush1.xpose.msra.mxu0 0.0
  %240 = vmatprep.subr.mxu0 0.0
  %241 = vmatpush1.xpose.msra.mxu0 0.0
  %242 = vmatprep.subr.mxu0 0.0
  %243 = vmatpush1.xpose.msra.mxu0 0.0
  %244 = vmatprep.subr.mxu0 0.0
  %245 = vmatpush1.xpose.msra.mxu0 0.0
  %246 = vmatprep.subr.mxu0 0.0
  %247 = vmatpush1.xpose.msra.mxu0 0.0
  %248 = vmatprep.subr.mxu0 0.0
  %249 = vmatpush1.xpose.msra.mxu0 0.0
  %250 = vmatprep.subr.mxu0 0.0
  %251 = vmatpush1.xpose.msra.mxu0 0.0
  %252 = vmatprep.subr.mxu0 0.0
  %253 = vmatpush1.xpose.msra.mxu0 0.0
  %254 = vmatprep.subr.mxu0 0.0
  %255 = vmatpush1.xpose.msra.mxu0 0.0
  %256 = vmatprep.subr.mxu0 0.0
  %257 = vmatpush1.xpose.msra.mxu0 0.0
  %258 = vmatprep.subr.mxu0 0.0
  %259 = vmatpush1.xpose.msra.mxu0 0.0
  %260 = vmatprep.subr.mxu0 0.0
  %261 = vmatpush1.xpose.msra.mxu0 0.0
  %262 = vmatprep.subr.mxu0 0.0
  %263 = vmatpush1.xpose.msra.mxu0 0.0
  %264 = vmatprep.subr.mxu0 0.0
  %265 = vmatpush1.xpose.msra.mxu0 0.0
  %266 = vmatprep.subr.mxu0 0.0
  %267 = vmatpush1.xpose.msra.mxu0 0.0
  %268 = vmatprep.subr.mxu0 0.0
  %269 = vmatpush1.xpose.msra.mxu0 0.0
  %270 = vmatprep.subr.mxu0 0.0
  %271 = vmatpush1.xpose.msra.mxu0 0.0
  %272 = vmatprep.subr.mxu0 0.0
  %273 = vmatpush1.xpose.msra.mxu0 0.0
  %274 = vmatprep.subr.mxu0 0.0
  %275 = vmatpush1.xpose.msra.mxu0 0.0
  %276 = vmatprep.subr.mxu0 0.0
  %277 = vmatpush1.xpose.msra.mxu0 0.0
  %278 = vmatprep.subr.mxu0 0.0
  %279 = vmatpush1.xpose.msra.mxu0 0.0
  %280 = vmatprep.mubr.f32.mxu0 0.0
  %281 = vmatmul.mubr.f32.gmra.mrb[0].mxu0 %v212
  %v282 = vpop.f32.mrb[0].mxu0
  %v283 = vadd.f32 0.0, %v282
  %v284 = vpop.f32.mrb[0].mxu0
  %285 = vdwg.mxu0
  %286 = vrot.lane.b32.xlu0 %v124, 96
  %v287 = vpop.permute.xlu0 %286
  %v288 = vsel %vm135, %v124, 0
  %v290 = vsel %vm135, %v287, 0
  %292 = vmatprep.subr.mxu0 0.0
  %293 = vmatpush1.xpose.msra.mxu0 %v290
  %294 = vmatprep.subr.mxu0 0.0
  %295 = vmatpush1.xpose.msra.mxu0 0.0
  %296 = vmatprep.subr.mxu0 0.0
  %297 = vmatpush1.xpose.msra.mxu0 0.0
  %298 = vmatprep.subr.mxu0 0.0
  %299 = vmatpush1.xpose.msra.mxu0 0.0
  %300 = vmatprep.subr.mxu0 0.0
  %301 = vmatpush1.xpose.msra.mxu0 0.0
  %302 = vmatprep.subr.mxu0 0.0
  %303 = vmatpush1.xpose.msra.mxu0 0.0
  %304 = vmatprep.subr.mxu0 0.0
  %305 = vmatpush1.xpose.msra.mxu0 0.0
  %306 = vmatprep.subr.mxu0 0.0
  %307 = vmatpush1.xpose.msra.mxu0 0.0
  %308 = vmatprep.subr.mxu0 0.0
  %309 = vmatpush1.xpose.msra.mxu0 0.0
  %310 = vmatprep.subr.mxu0 0.0
  %311 = vmatpush1.xpose.msra.mxu0 0.0
  %312 = vmatprep.subr.mxu0 0.0
  %313 = vmatpush1.xpose.msra.mxu0 0.0
  %314 = vmatprep.subr.mxu0 0.0
  %315 = vmatpush1.xpose.msra.mxu0 0.0
  %316 = vmatprep.subr.mxu0 0.0
  %317 = vmatpush1.xpose.msra.mxu0 0.0
  %318 = vmatprep.subr.mxu0 0.0
  %319 = vmatpush1.xpose.msra.mxu0 0.0
  %320 = vmatprep.subr.mxu0 0.0
  %321 = vmatpush1.xpose.msra.mxu0 0.0
  %322 = vmatprep.subr.mxu0 0.0
  %323 = vmatpush1.xpose.msra.mxu0 0.0
  %324 = vmatprep.subr.mxu0 0.0
  %325 = vmatpush1.xpose.msra.mxu0 0.0
  %326 = vmatprep.subr.mxu0 0.0
  %327 = vmatpush1.xpose.msra.mxu0 0.0
  %328 = vmatprep.subr.mxu0 0.0
  %329 = vmatpush1.xpose.msra.mxu0 0.0
  %330 = vmatprep.subr.mxu0 0.0
  %331 = vmatpush1.xpose.msra.mxu0 0.0
  %332 = vmatprep.subr.mxu0 0.0
  %333 = vmatpush1.xpose.msra.mxu0 0.0
  %334 = vmatprep.subr.mxu0 0.0
  %335 = vmatpush1.xpose.msra.mxu0 0.0
  %336 = vmatprep.subr.mxu0 0.0
  %337 = vmatpush1.xpose.msra.mxu0 0.0
  %338 = vmatprep.subr.mxu0 0.0
  %339 = vmatpush1.xpose.msra.mxu0 0.0
  %340 = vmatprep.subr.mxu0 0.0
  %341 = vmatpush1.xpose.msra.mxu0 0.0
  %342 = vmatprep.subr.mxu0 0.0
  %343 = vmatpush1.xpose.msra.mxu0 0.0
  %344 = vmatprep.subr.mxu0 0.0
  %345 = vmatpush1.xpose.msra.mxu0 0.0
  %346 = vmatprep.subr.mxu0 0.0
  %347 = vmatpush1.xpose.msra.mxu0 0.0
  %348 = vmatprep.subr.mxu0 0.0
  %349 = vmatpush1.xpose.msra.mxu0 0.0
  %350 = vmatprep.subr.mxu0 0.0
  %351 = vmatpush1.xpose.msra.mxu0 0.0
  %352 = vmatprep.subr.mxu0 0.0
  %353 = vmatpush1.xpose.msra.mxu0 0.0
  %354 = vmatprep.subr.mxu0 0.0
  %355 = vmatpush1.xpose.msra.mxu0 0.0
  %356 = vmatprep.mubr.f32.mxu0 0.0
  %357 = vmatmul.mubr.f32.gmra.mrb[0].mxu0 %v288
  %v358 = vpop.f32.mrb[0].mxu0
  %v359 = vadd.f32 0.0, %v358
  %v360 = vpop.f32.mrb[0].mxu0
  %361 = vdwg.mxu0
  %362 = vrot.lane.b32.xlu0 %v132, 96
  %v363 = vpop.permute.xlu0 %362
  %v364 = vsel %vm135, %v132, 0
  %v366 = vsel %vm135, %v363, 0
  %368 = vmatprep.subr.mxu0 0.0
  %369 = vmatpush1.xpose.msra.mxu0 %v366
  %370 = vmatprep.subr.mxu0 0.0
  %371 = vmatpush1.xpose.msra.mxu0 0.0
  %372 = vmatprep.subr.mxu0 0.0
  %373 = vmatpush1.xpose.msra.mxu0 0.0
  %374 = vmatprep.subr.mxu0 0.0
  %375 = vmatpush1.xpose.msra.mxu0 0.0
  %376 = vmatprep.subr.mxu0 0.0
  %377 = vmatpush1.xpose.msra.mxu0 0.0
  %378 = vmatprep.subr.mxu0 0.0
  %379 = vmatpush1.xpose.msra.mxu0 0.0
  %380 = vmatprep.subr.mxu0 0.0
  %381 = vmatpush1.xpose.msra.mxu0 0.0
  %382 = vmatprep.subr.mxu0 0.0
  %383 = vmatpush1.xpose.msra.mxu0 0.0
  %384 = vmatprep.subr.mxu0 0.0
  %385 = vmatpush1.xpose.msra.mxu0 0.0
  %386 = vmatprep.subr.mxu0 0.0
  %387 = vmatpush1.xpose.msra.mxu0 0.0
  %388 = vmatprep.subr.mxu0 0.0
  %389 = vmatpush1.xpose.msra.mxu0 0.0
  %390 = vmatprep.subr.mxu0 0.0
  %391 = vmatpush1.xpose.msra.mxu0 0.0
  %392 = vmatprep.subr.mxu0 0.0
  %393 = vmatpush1.xpose.msra.mxu0 0.0
  %394 = vmatprep.subr.mxu0 0.0
  %395 = vmatpush1.xpose.msra.mxu0 0.0
  %396 = vmatprep.subr.mxu0 0.0
  %397 = vmatpush1.xpose.msra.mxu0 0.0
  %398 = vmatprep.subr.mxu0 0.0
  %399 = vmatpush1.xpose.msra.mxu0 0.0
  %400 = vmatprep.subr.mxu0 0.0
  %401 = vmatpush1.xpose.msra.mxu0 0.0
  %402 = vmatprep.subr.mxu0 0.0
  %403 = vmatpush1.xpose.msra.mxu0 0.0
  %404 = vmatprep.subr.mxu0 0.0
  %405 = vmatpush1.xpose.msra.mxu0 0.0
  %406 = vmatprep.subr.mxu0 0.0
  %407 = vmatpush1.xpose.msra.mxu0 0.0
  %408 = vmatprep.subr.mxu0 0.0
  %409 = vmatpush1.xpose.msra.mxu0 0.0
  %410 = vmatprep.subr.mxu0 0.0
  %411 = vmatpush1.xpose.msra.mxu0 0.0
  %412 = vmatprep.subr.mxu0 0.0
  %413 = vmatpush1.xpose.msra.mxu0 0.0
  %414 = vmatprep.subr.mxu0 0.0
  %415 = vmatpush1.xpose.msra.mxu0 0.0
  %416 = vmatprep.subr.mxu0 0.0
  %417 = vmatpush1.xpose.msra.mxu0 0.0
  %418 = vmatprep.subr.mxu0 0.0
  %419 = vmatpush1.xpose.msra.mxu0 0.0
  %420 = vmatprep.subr.mxu0 0.0
  %421 = vmatpush1.xpose.msra.mxu0 0.0
  %422 = vmatprep.subr.mxu0 0.0
  %423 = vmatpush1.xpose.msra.mxu0 0.0
  %424 = vmatprep.subr.mxu0 0.0
  %425 = vmatpush1.xpose.msra.mxu0 0.0
  %426 = vmatprep.subr.mxu0 0.0
  %427 = vmatpush1.xpose.msra.mxu0 0.0
  %428 = vmatprep.subr.mxu0 0.0
  %429 = vmatpush1.xpose.msra.mxu0 0.0
  %430 = vmatprep.subr.mxu0 0.0
  %431 = vmatpush1.xpose.msra.mxu0 0.0
  %432 = vmatprep.mubr.f32.mxu0 0.0
  %433 = vmatmul.mubr.f32.gmra.mrb[0].mxu0 %v364
  %v434 = vpop.f32.mrb[0].mxu0
  %v435 = vadd.f32 0.0, %v434
  %v436 = vpop.f32.mrb[0].mxu0
  %437 = vdwg.mxu0
  %v438 = vmul.f32 %v207, 0.25
  %v439 = vmul.f32 %v283, 0.25
  %v440 = vmul.f32 %v359, 0.25
  %v441 = vmul.f32 %v435, 0.25
  %v446 = vlaneseq
  %v447 = vshrl.u32 %v446, 7
  %v448 = vsub.s32 0, %v447
  %v449 = vrot.slane %v50, %v448
  %v450 = vlaneseq
  %v451 = vshrl.u32 %v450, 7
  %v452 = vsub.s32 0, %v451
  %v453 = vrot.slane %v51, %v452
  %v454 = vlaneseq
  %v455 = vshrl.u32 %v454, 7
  %v456 = vsub.s32 0, %v455
  %v457 = vrot.slane %v52, %v456
  %v458 = vlaneseq
  %v459 = vshrl.u32 %v458, 7
  %v460 = vsub.s32 0, %v459
  %v461 = vrot.slane %v53, %v460
  %v466 = vadd.f32 %v438, %v449
  %v467 = vadd.f32 %v439, %v453
  %v468 = vadd.f32 %v440, %v457
  %v469 = vadd.f32 %v441, %v461
  %vm470 = vcmask 64512
  %v471 = vsel %vm470, %v466, -inf
  %472 = vmax.xlane.f32.xlu0 %v471
  %v473 = vpop.xlane.xlu0 %472
  %v474 = vsel %vm470, %v467, -inf
  %475 = vmax.xlane.f32.xlu0 %v474
  %v476 = vpop.xlane.xlu0 %475
  %v477 = vsel %vm470, %v468, -inf
  %478 = vmax.xlane.f32.xlu0 %v477
  %v479 = vpop.xlane.xlu0 %478
  %v480 = vsel %vm470, %v469, -inf
  %481 = vmax.xlane.f32.xlu0 %v480
  %v482 = vpop.xlane.xlu0 %481
  %v483 = vsub.f32 %v466, %v473
  %v484 = vsub.f32 %v467, %v476
  %v485 = vsub.f32 %v468, %v479
  %v486 = vsub.f32 %v469, %v482
  %v487 = vmul.f32 %v483, 1.442695
  %v488 = vpow.pop %v487
  %v489 = vmul.f32 %v484, 1.442695
  %v490 = vpow.pop %v489
  %v491 = vmul.f32 %v485, 1.442695
  %v492 = vpow.pop %v491
  %v493 = vmul.f32 %v486, 1.442695
  %v494 = vpow.pop %v493
  %v495 = vsel %vm470, %v488, 0.0
  %496 = vadd.xlane.f32.xlu0 %v495
  %v497 = vpop.xlane.xlu0 %496
  %v498 = vsel %vm470, %v490, 0.0
  %499 = vadd.xlane.f32.xlu0 %v498
  %v500 = vpop.xlane.xlu0 %499
  %v501 = vsel %vm470, %v492, 0.0
  %502 = vadd.xlane.f32.xlu0 %v501
  %v503 = vpop.xlane.xlu0 %502
  %v504 = vsel %vm470, %v494, 0.0
  %505 = vadd.xlane.f32.xlu0 %v504
  %v506 = vpop.xlane.xlu0 %505
  %v507 = vrcp.pop %v497
  %v508 = vrcp.pop %v500
  %v509 = vrcp.pop %v503
  %v510 = vrcp.pop %v506
  %v511 = vmul.f32 %v488, %v507
  %v512 = vmul.f32 %v490, %v508
  %v513 = vmul.f32 %v492, %v509
  %v514 = vmul.f32 %v494, %v510
  %515 = vrot.lane.b32.xlu0 %v121, 64
  %v516 = vpop.permute.xlu0 %515
  %v519 = vsel %vm470, %v511, 0
  %521 = vmatprep.subr.mxu0 0.0
  %522 = vmatpush1.msra.mxu0 %v516
  %523 = vmatprep.subr.mxu0 0.0
  %524 = vmatpush1.msra.mxu0 0.0
  %525 = vmatprep.subr.mxu0 0.0
  %526 = vmatpush1.msra.mxu0 0.0
  %527 = vmatprep.subr.mxu0 0.0
  %528 = vmatpush1.msra.mxu0 0.0
  %529 = vmatprep.subr.mxu0 0.0
  %530 = vmatpush1.msra.mxu0 0.0
  %531 = vmatprep.subr.mxu0 0.0
  %532 = vmatpush1.msra.mxu0 0.0
  %533 = vmatprep.subr.mxu0 0.0
  %534 = vmatpush1.msra.mxu0 0.0
  %535 = vmatprep.subr.mxu0 0.0
  %536 = vmatpush1.msra.mxu0 0.0
  %537 = vmatprep.subr.mxu0 0.0
  %538 = vmatpush1.msra.mxu0 0.0
  %539 = vmatprep.subr.mxu0 0.0
  %540 = vmatpush1.msra.mxu0 0.0
  %541 = vmatprep.subr.mxu0 0.0
  %542 = vmatpush1.msra.mxu0 0.0
  %543 = vmatprep.subr.mxu0 0.0
  %544 = vmatpush1.msra.mxu0 0.0
  %545 = vmatprep.subr.mxu0 0.0
  %546 = vmatpush1.msra.mxu0 0.0
  %547 = vmatprep.subr.mxu0 0.0
  %548 = vmatpush1.msra.mxu0 0.0
  %549 = vmatprep.subr.mxu0 0.0
  %550 = vmatpush1.msra.mxu0 0.0
  %551 = vmatprep.subr.mxu0 0.0
  %552 = vmatpush1.msra.mxu0 0.0
  %553 = vmatprep.subr.mxu0 0.0
  %554 = vmatpush1.msra.mxu0 0.0
  %555 = vmatprep.subr.mxu0 0.0
  %556 = vmatpush1.msra.mxu0 0.0
  %557 = vmatprep.subr.mxu0 0.0
  %558 = vmatpush1.msra.mxu0 0.0
  %559 = vmatprep.subr.mxu0 0.0
  %560 = vmatpush1.msra.mxu0 0.0
  %561 = vmatprep.subr.mxu0 0.0
  %562 = vmatpush1.msra.mxu0 0.0
  %563 = vmatprep.subr.mxu0 0.0
  %564 = vmatpush1.msra.mxu0 0.0
  %565 = vmatprep.subr.mxu0 0.0
  %566 = vmatpush1.msra.mxu0 0.0
  %567 = vmatprep.subr.mxu0 0.0
  %568 = vmatpush1.msra.mxu0 0.0
  %569 = vmatprep.subr.mxu0 0.0
  %570 = vmatpush1.msra.mxu0 0.0
  %571 = vmatprep.subr.mxu0 0.0
  %572 = vmatpush1.msra.mxu0 0.0
  %573 = vmatprep.subr.mxu0 0.0
  %574 = vmatpush1.msra.mxu0 0.0
  %575 = vmatprep.subr.mxu0 0.0
  %576 = vmatpush1.msra.mxu0 0.0
  %577 = vmatprep.subr.mxu0 0.0
  %578 = vmatpush1.msra.mxu0 0.0
  %579 = vmatprep.subr.mxu0 0.0
  %580 = vmatpush1.msra.mxu0 0.0
  %581 = vmatprep.subr.mxu0 0.0
  %582 = vmatpush1.msra.mxu0 0.0
  %583 = vmatprep.subr.mxu0 0.0
  %584 = vmatpush1.msra.mxu0 0.0
  %585 = vmatprep.mubr.f32.mxu0 0.0
  %586 = vmatmul.mubr.f32.gmra.mrb[0].mxu0 %v519
  %v587 = vpop.f32.mrb[0].mxu0
  %v588 = vadd.f32 0.0, %v587
  %v589 = vpop.f32.mrb[0].mxu0
  %590 = vdwg.mxu0
  %591 = vrot.lane.b32.xlu0 %v129, 64
  %v592 = vpop.permute.xlu0 %591
  %v595 = vsel %vm470, %v512, 0
  %597 = vmatprep.subr.mxu0 0.0
  %598 = vmatpush1.msra.mxu0 %v592
  %599 = vmatprep.subr.mxu0 0.0
  %600 = vmatpush1.msra.mxu0 0.0
  %601 = vmatprep.subr.mxu0 0.0
  %602 = vmatpush1.msra.mxu0 0.0
  %603 = vmatprep.subr.mxu0 0.0
  %604 = vmatpush1.msra.mxu0 0.0
  %605 = vmatprep.subr.mxu0 0.0
  %606 = vmatpush1.msra.mxu0 0.0
  %607 = vmatprep.subr.mxu0 0.0
  %608 = vmatpush1.msra.mxu0 0.0
  %609 = vmatprep.subr.mxu0 0.0
  %610 = vmatpush1.msra.mxu0 0.0
  %611 = vmatprep.subr.mxu0 0.0
  %612 = vmatpush1.msra.mxu0 0.0
  %613 = vmatprep.subr.mxu0 0.0
  %614 = vmatpush1.msra.mxu0 0.0
  %615 = vmatprep.subr.mxu0 0.0
  %616 = vmatpush1.msra.mxu0 0.0
  %617 = vmatprep.subr.mxu0 0.0
  %618 = vmatpush1.msra.mxu0 0.0
  %619 = vmatprep.subr.mxu0 0.0
  %620 = vmatpush1.msra.mxu0 0.0
  %621 = vmatprep.subr.mxu0 0.0
  %622 = vmatpush1.msra.mxu0 0.0
  %623 = vmatprep.subr.mxu0 0.0
  %624 = vmatpush1.msra.mxu0 0.0
  %625 = vmatprep.subr.mxu0 0.0
  %626 = vmatpush1.msra.mxu0 0.0
  %627 = vmatprep.subr.mxu0 0.0
  %628 = vmatpush1.msra.mxu0 0.0
  %629 = vmatprep.subr.mxu0 0.0
  %630 = vmatpush1.msra.mxu0 0.0
  %631 = vmatprep.subr.mxu0 0.0
  %632 = vmatpush1.msra.mxu0 0.0
  %633 = vmatprep.subr.mxu0 0.0
  %634 = vmatpush1.msra.mxu0 0.0
  %635 = vmatprep.subr.mxu0 0.0
  %636 = vmatpush1.msra.mxu0 0.0
  %637 = vmatprep.subr.mxu0 0.0
  %638 = vmatpush1.msra.mxu0 0.0
  %639 = vmatprep.subr.mxu0 0.0
  %640 = vmatpush1.msra.mxu0 0.0
  %641 = vmatprep.subr.mxu0 0.0
  %642 = vmatpush1.msra.mxu0 0.0
  %643 = vmatprep.subr.mxu0 0.0
  %644 = vmatpush1.msra.mxu0 0.0
  %645 = vmatprep.subr.mxu0 0.0
  %646 = vmatpush1.msra.mxu0 0.0
  %647 = vmatprep.subr.mxu0 0.0
  %648 = vmatpush1.msra.mxu0 0.0
  %649 = vmatprep.subr.mxu0 0.0
  %650 = vmatpush1.msra.mxu0 0.0
  %651 = vmatprep.subr.mxu0 0.0
  %652 = vmatpush1.msra.mxu0 0.0
  %653 = vmatprep.subr.mxu0 0.0
  %654 = vmatpush1.msra.mxu0 0.0
  %655 = vmatprep.subr.mxu0 0.0
  %656 = vmatpush1.msra.mxu0 0.0
  %657 = vmatprep.subr.mxu0 0.0
  %658 = vmatpush1.msra.mxu0 0.0
  %659 = vmatprep.subr.mxu0 0.0
  %660 = vmatpush1.msra.mxu0 0.0
  %661 = vmatprep.mubr.f32.mxu0 0.0
  %662 = vmatmul.mubr.f32.gmra.mrb[0].mxu0 %v595
  %v663 = vpop.f32.mrb[0].mxu0
  %v664 = vadd.f32 0.0, %v663
  %v665 = vpop.f32.mrb[0].mxu0
  %666 = vdwg.mxu0
  %667 = vrot.lane.b32.xlu0 %v124, 64
  %v668 = vpop.permute.xlu0 %667
  %v671 = vsel %vm470, %v513, 0
  %673 = vmatprep.subr.mxu0 0.0
  %674 = vmatpush1.msra.mxu0 %v668
  %675 = vmatprep.subr.mxu0 0.0
  %676 = vmatpush1.msra.mxu0 0.0
  %677 = vmatprep.subr.mxu0 0.0
  %678 = vmatpush1.msra.mxu0 0.0
  %679 = vmatprep.subr.mxu0 0.0
  %680 = vmatpush1.msra.mxu0 0.0
  %681 = vmatprep.subr.mxu0 0.0
  %682 = vmatpush1.msra.mxu0 0.0
  %683 = vmatprep.subr.mxu0 0.0
  %684 = vmatpush1.msra.mxu0 0.0
  %685 = vmatprep.subr.mxu0 0.0
  %686 = vmatpush1.msra.mxu0 0.0
  %687 = vmatprep.subr.mxu0 0.0
  %688 = vmatpush1.msra.mxu0 0.0
  %689 = vmatprep.subr.mxu0 0.0
  %690 = vmatpush1.msra.mxu0 0.0
  %691 = vmatprep.subr.mxu0 0.0
  %692 = vmatpush1.msra.mxu0 0.0
  %693 = vmatprep.subr.mxu0 0.0
  %694 = vmatpush1.msra.mxu0 0.0
  %695 = vmatprep.subr.mxu0 0.0
  %696 = vmatpush1.msra.mxu0 0.0
  %697 = vmatprep.subr.mxu0 0.0
  %698 = vmatpush1.msra.mxu0 0.0
  %699 = vmatprep.subr.mxu0 0.0
  %700 = vmatpush1.msra.mxu0 0.0
  %701 = vmatprep.subr.mxu0 0.0
  %702 = vmatpush1.msra.mxu0 0.0
  %703 = vmatprep.subr.mxu0 0.0
  %704 = vmatpush1.msra.mxu0 0.0
  %705 = vmatprep.subr.mxu0 0.0
  %706 = vmatpush1.msra.mxu0 0.0
  %707 = vmatprep.subr.mxu0 0.0
  %708 = vmatpush1.msra.mxu0 0.0
  %709 = vmatprep.subr.mxu0 0.0
  %710 = vmatpush1.msra.mxu0 0.0
  %711 = vmatprep.subr.mxu0 0.0
  %712 = vmatpush1.msra.mxu0 0.0
  %713 = vmatprep.subr.mxu0 0.0
  %714 = vmatpush1.msra.mxu0 0.0
  %715 = vmatprep.subr.mxu0 0.0
  %716 = vmatpush1.msra.mxu0 0.0
  %717 = vmatprep.subr.mxu0 0.0
  %718 = vmatpush1.msra.mxu0 0.0
  %719 = vmatprep.subr.mxu0 0.0
  %720 = vmatpush1.msra.mxu0 0.0
  %721 = vmatprep.subr.mxu0 0.0
  %722 = vmatpush1.msra.mxu0 0.0
  %723 = vmatprep.subr.mxu0 0.0
  %724 = vmatpush1.msra.mxu0 0.0
  %725 = vmatprep.subr.mxu0 0.0
  %726 = vmatpush1.msra.mxu0 0.0
  %727 = vmatprep.subr.mxu0 0.0
  %728 = vmatpush1.msra.mxu0 0.0
  %729 = vmatprep.subr.mxu0 0.0
  %730 = vmatpush1.msra.mxu0 0.0
  %731 = vmatprep.subr.mxu0 0.0
  %732 = vmatpush1.msra.mxu0 0.0
  %733 = vmatprep.subr.mxu0 0.0
  %734 = vmatpush1.msra.mxu0 0.0
  %735 = vmatprep.subr.mxu0 0.0
  %736 = vmatpush1.msra.mxu0 0.0
  %737 = vmatprep.mubr.f32.mxu0 0.0
  %738 = vmatmul.mubr.f32.gmra.mrb[0].mxu0 %v671
  %v739 = vpop.f32.mrb[0].mxu0
  %v740 = vadd.f32 0.0, %v739
  %v741 = vpop.f32.mrb[0].mxu0
  %742 = vdwg.mxu0
  %743 = vrot.lane.b32.xlu0 %v132, 64
  %v744 = vpop.permute.xlu0 %743
  %v747 = vsel %vm470, %v514, 0
  %749 = vmatprep.subr.mxu0 0.0
  %750 = vmatpush1.msra.mxu0 %v744
  %751 = vmatprep.subr.mxu0 0.0
  %752 = vmatpush1.msra.mxu0 0.0
  %753 = vmatprep.subr.mxu0 0.0
  %754 = vmatpush1.msra.mxu0 0.0
  %755 = vmatprep.subr.mxu0 0.0
  %756 = vmatpush1.msra.mxu0 0.0
  %757 = vmatprep.subr.mxu0 0.0
  %758 = vmatpush1.msra.mxu0 0.0
  %759 = vmatprep.subr.mxu0 0.0
  %760 = vmatpush1.msra.mxu0 0.0
  %761 = vmatprep.subr.mxu0 0.0
  %762 = vmatpush1.msra.mxu0 0.0
  %763 = vmatprep.subr.mxu0 0.0
  %764 = vmatpush1.msra.mxu0 0.0
  %765 = vmatprep.subr.mxu0 0.0
  %766 = vmatpush1.msra.mxu0 0.0
  %767 = vmatprep.subr.mxu0 0.0
  %768 = vmatpush1.msra.mxu0 0.0
  %769 = vmatprep.subr.mxu0 0.0
  %770 = vmatpush1.msra.mxu0 0.0
  %771 = vmatprep.subr.mxu0 0.0
  %772 = vmatpush1.msra.mxu0 0.0
  %773 = vmatprep.subr.mxu0 0.0
  %774 = vmatpush1.msra.mxu0 0.0
  %775 = vmatprep.subr.mxu0 0.0
  %776 = vmatpush1.msra.mxu0 0.0
  %777 = vmatprep.subr.mxu0 0.0
  %778 = vmatpush1.msra.mxu0 0.0
  %779 = vmatprep.subr.mxu0 0.0
  %780 = vmatpush1.msra.mxu0 0.0
  %781 = vmatprep.subr.mxu0 0.0
  %782 = vmatpush1.msra.mxu0 0.0
  %783 = vmatprep.subr.mxu0 0.0
  %784 = vmatpush1.msra.mxu0 0.0
  %785 = vmatprep.subr.mxu0 0.0
  %786 = vmatpush1.msra.mxu0 0.0
  %787 = vmatprep.subr.mxu0 0.0
  %788 = vmatpush1.msra.mxu0 0.0
  %789 = vmatprep.subr.mxu0 0.0
  %790 = vmatpush1.msra.mxu0 0.0
  %791 = vmatprep.subr.mxu0 0.0
  %792 = vmatpush1.msra.mxu0 0.0
  %793 = vmatprep.subr.mxu0 0.0
  %794 = vmatpush1.msra.mxu0 0.0
  %795 = vmatprep.subr.mxu0 0.0
  %796 = vmatpush1.msra.mxu0 0.0
  %797 = vmatprep.subr.mxu0 0.0
  %798 = vmatpush1.msra.mxu0 0.0
  %799 = vmatprep.subr.mxu0 0.0
  %800 = vmatpush1.msra.mxu0 0.0
  %801 = vmatprep.subr.mxu0 0.0
  %802 = vmatpush1.msra.mxu0 0.0
  %803 = vmatprep.subr.mxu0 0.0
  %804 = vmatpush1.msra.mxu0 0.0
  %805 = vmatprep.subr.mxu0 0.0
  %806 = vmatpush1.msra.mxu0 0.0
  %807 = vmatprep.subr.mxu0 0.0
  %808 = vmatpush1.msra.mxu0 0.0
  %809 = vmatprep.subr.mxu0 0.0
  %810 = vmatpush1.msra.mxu0 0.0
  %811 = vmatprep.subr.mxu0 0.0
  %812 = vmatpush1.msra.mxu0 0.0
  %813 = vmatprep.mubr.f32.mxu0 0.0
  %814 = vmatmul.mubr.f32.gmra.mrb[0].mxu0 %v747
  %v815 = vpop.f32.mrb[0].mxu0
  %v816 = vadd.f32 0.0, %v815
  %v817 = vpop.f32.mrb[0].mxu0
  %818 = vdwg.mxu0
  %820 = vrot.lane.b32.xlu0 %v664, 16
  %v821 = vpop.permute.xlu0 %820
  %v823 = vsel %vm135, %v588, %v821
  %825 = vrot.lane.b32.xlu0 %v816, 16
  %v826 = vpop.permute.xlu0 %825
  %v828 = vsel %vm135, %v740, %v826
  %v829 = vpack.c.bf16 %v828, %v823
  %v830 = vld [vmem:[%s4] sm:$0xf]
  %v831 = vld [vmem:[%s4 + $0x4] sm:$0xf]
  %v832 = vld [vmem:[%s4 + $0x8] sm:$0xf]
  %v833 = vld [vmem:[%s4 + $0xc] sm:$0xf]
  %v834 = vld [vmem:[%s5] sm:$0x1]
  %v836 = vlaneseq
  %v837 = vshrl.u32 %v836, 7
  %v838 = vsub.s32 0, %v837
  %v839 = vrot.slane %v834, %v838
  %v845 = vunpack.c.l.b16 %v830
  %v846 = vunpack.c.l.b16 %v831
  %v847 = vunpack.c.l.b16 %v832
  %v848 = vunpack.c.l.b16 %v833
  %v849 = vpack.c.b16 %v846, %v845
  %v850 = vpack.c.b16 %v848, %v847
  %v854 = vsel %vm82, %v829, 0
  %856 = vmatprep.subr.bf16.mxu0 0
  %857 = vmatpush1.bf16.msra.mxu0 %v849
  %858 = vmatprep.subr.bf16.mxu0 0
  %859 = vmatpush1.bf16.msra.mxu0 %v850
  %860 = vmatprep.subr.bf16.mxu0 0
  %861 = vmatpush1.bf16.msra.mxu0 0
  %862 = vmatprep.subr.bf16.mxu0 0
  %863 = vmatpush1.bf16.msra.mxu0 0
  %864 = vmatprep.subr.bf16.mxu0 0
  %865 = vmatpush1.bf16.msra.mxu0 0
  %866 = vmatprep.subr.bf16.mxu0 0
  %867 = vmatpush1.bf16.msra.mxu0 0
  %868 = vmatprep.subr.bf16.mxu0 0
  %869 = vmatpush1.bf16.msra.mxu0 0
  %870 = vmatprep.subr.bf16.mxu0 0
  %871 = vmatpush1.bf16.msra.mxu0 0
  %872 = vmatprep.subr.bf16.mxu0 0
  %873 = vmatpush1.bf16.msra.mxu0 0
  %874 = vmatprep.subr.bf16.mxu0 0
  %875 = vmatpush1.bf16.msra.mxu0 0
  %876 = vmatprep.subr.bf16.mxu0 0
  %877 = vmatpush1.bf16.msra.mxu0 0
  %878 = vmatprep.subr.bf16.mxu0 0
  %879 = vmatpush1.bf16.msra.mxu0 0
  %880 = vmatprep.subr.bf16.mxu0 0
  %881 = vmatpush1.bf16.msra.mxu0 0
  %882 = vmatprep.subr.bf16.mxu0 0
  %883 = vmatpush1.bf16.msra.mxu0 0
  %884 = vmatprep.subr.bf16.mxu0 0
  %885 = vmatpush1.bf16.msra.mxu0 0
  %886 = vmatprep.subr.bf16.mxu0 0
  %887 = vmatpush1.bf16.msra.mxu0 0
  %888 = vmatprep.mubr.bf16.mxu0 0
  %889 = vmatmul.mubr.bf16.gmra.mrb[0].mxu0 %v854
  %v890 = vpop.f32.mrb[0].mxu0
  %v891 = vadd.f32 %v839, %v890
  %v892 = vpop.f32.mrb[0].mxu0
  %v893 = vpop.f32.mrb[0].mxu0
  %v894 = vadd.f32 %v839, %v893
  %v895 = vpop.f32.mrb[0].mxu0
  %896 = vdwg.mxu0
  %v897 = vunpack.c.l.bf16 %v48
  %v898 = vunpack.c.l.bf16 %v49
  %v899 = vadd.f32 %v897, %v891
  %v900 = vadd.f32 %v898, %v894
  %v901 = vld [vmem:[%s6] sm:$0x1]
  %v902 = vld [vmem:[%s7] sm:$0x1]
  %v903 = vsel %vm82, %v899, 0.0
  %904 = vadd.xlane.f32.xlu0 %v903
  %v905 = vpop.xlane.xlu0 %904
  %v906 = vsel %vm82, %v900, 0.0
  %907 = vadd.xlane.f32.xlu0 %v906
  %v908 = vpop.xlane.xlu0 %907
  %v909 = vrcp.pop 32.0
  %v910 = vmul.f32 %v905, %v909
  %v911 = vmul.f32 %v908, %v909
  %v912 = vsub.f32 %v899, %v910
  %v913 = vsub.f32 %v900, %v911
  %v914 = vmul.f32 %v912, %v912
  %v915 = vmul.f32 %v913, %v913
  %v916 = vsel %vm82, %v914, 0.0
  %917 = vadd.xlane.f32.xlu0 %v916
  %v918 = vpop.xlane.xlu0 %917
  %v919 = vsel %vm82, %v915, 0.0
  %920 = vadd.xlane.f32.xlu0 %v919
  %v921 = vpop.xlane.xlu0 %920
  %v922 = vmul.f32 %v918, %v909
  %v923 = vmul.f32 %v921, %v909
  %v924 = vadd.f32 %v922, 1e-12
  %v925 = vadd.f32 %v923, 1e-12
  %v926 = vrsqrt.pop %v924
  %v927 = vrsqrt.pop %v925
  %v928 = vmul.f32 %v912, %v926
  %v929 = vmul.f32 %v913, %v927
  %v931 = vlaneseq
  %v932 = vshrl.u32 %v931, 7
  %v933 = vsub.s32 0, %v932
  %v934 = vrot.slane %v901, %v933
  %v936 = vmul.f32 %v928, %v934
  %v937 = vmul.f32 %v929, %v934
  %v939 = vlaneseq
  %v940 = vshrl.u32 %v939, 7
  %v941 = vsub.s32 0, %v940
  %v942 = vrot.slane %v902, %v941
  %v944 = vadd.f32 %v936, %v942
  %v945 = vadd.f32 %v937, %v942
  %v946 = vpack.c.bf16 %v945, %v944
  %v947 = vld [vmem:[%s8] sm:$0xf]
  %v948 = vld [vmem:[%s8 + $0x4] sm:$0xf]
  %v949 = vld [vmem:[%s8 + $0x8] sm:$0xf]
  %v950 = vld [vmem:[%s8 + $0xc] sm:$0xf]
  %v951 = vld [vmem:[%s9] sm:$0x1]
  %v953 = vlaneseq
  %v954 = vshrl.u32 %v953, 7
  %v955 = vsub.s32 0, %v954
  %v956 = vrot.slane %v951, %v955
  %v962 = vunpack.c.l.b16 %v947
  %v963 = vunpack.c.l.b16 %v948
  %v964 = vunpack.c.l.b16 %v949
  %v965 = vunpack.c.l.b16 %v950
  %v966 = vpack.c.b16 %v963, %v962
  %v967 = vpack.c.b16 %v965, %v964
  %v971 = vsel %vm82, %v946, 0
  %973 = vmatprep.subr.bf16.mxu0 0
  %974 = vmatpush1.bf16.msra.mxu0 %v966
  %975 = vmatprep.subr.bf16.mxu0 0
  %976 = vmatpush1.bf16.msra.mxu0 %v967
  %977 = vmatprep.subr.bf16.mxu0 0
  %978 = vmatpush1.bf16.msra.mxu0 0
  %979 = vmatprep.subr.bf16.mxu0 0
  %980 = vmatpush1.bf16.msra.mxu0 0
  %981 = vmatprep.subr.bf16.mxu0 0
  %982 = vmatpush1.bf16.msra.mxu0 0
  %983 = vmatprep.subr.bf16.mxu0 0
  %984 = vmatpush1.bf16.msra.mxu0 0
  %985 = vmatprep.subr.bf16.mxu0 0
  %986 = vmatpush1.bf16.msra.mxu0 0
  %987 = vmatprep.subr.bf16.mxu0 0
  %988 = vmatpush1.bf16.msra.mxu0 0
  %989 = vmatprep.subr.bf16.mxu0 0
  %990 = vmatpush1.bf16.msra.mxu0 0
  %991 = vmatprep.subr.bf16.mxu0 0
  %992 = vmatpush1.bf16.msra.mxu0 0
  %993 = vmatprep.subr.bf16.mxu0 0
  %994 = vmatpush1.bf16.msra.mxu0 0
  %995 = vmatprep.subr.bf16.mxu0 0
  %996 = vmatpush1.bf16.msra.mxu0 0
  %997 = vmatprep.subr.bf16.mxu0 0
  %998 = vmatpush1.bf16.msra.mxu0 0
  %999 = vmatprep.subr.bf16.mxu0 0
  %1000 = vmatpush1.bf16.msra.mxu0 0
  %1001 = vmatprep.subr.bf16.mxu0 0
  %1002 = vmatpush1.bf16.msra.mxu0 0
  %1003 = vmatprep.subr.bf16.mxu0 0
  %1004 = vmatpush1.bf16.msra.mxu0 0
  %1005 = vmatprep.mubr.bf16.mxu0 0
  %1006 = vmatmul.mubr.bf16.gmra.mrb[0].mxu0 %v971
  %v1007 = vpop.f32.mrb[0].mxu0
  %v1008 = vadd.f32 %v956, %v1007
  %v1009 = vpop.f32.mrb[0].mxu0
  %v1010 = vpop.f32.mrb[0].mxu0
  %v1011 = vadd.f32 %v956, %v1010
  %v1012 = vpop.f32.mrb[0].mxu0
  %1013 = vdwg.mxu0
  %v1014 = vmul.f32 %v1008, 0.5
  %v1015 = vmul.f32 %v1011, 0.5
  %v1016 = vmul.f32 %v1008, 0.044715
  %v1017 = vmul.f32 %v1011, 0.044715
  %v1018 = vmul.f32 %v1016, %v1008
  %v1019 = vmul.f32 %v1017, %v1011
  %v1020 = vmul.f32 %v1018, %v1008
  %v1021 = vmul.f32 %v1019, %v1011
  %v1022 = vadd.f32 %v1008, %v1020
  %v1023 = vadd.f32 %v1011, %v1021
  %v1024 = vmul.f32 %v1022, 0.7978846
  %v1025 = vmul.f32 %v1023, 0.7978846
  %v1026 = vtanh.pop %v1024
  %v1027 = vtanh.pop %v1025
  %v1028 = vadd.f32 %v1026, 1.0
  %v1029 = vadd.f32 %v1027, 1.0
  %v1030 = vmul.f32 %v1014, %v1028
  %v1031 = vmul.f32 %v1015, %v1029
  %v1032 = vpack.c.bf16 %v1031, %v1030
  %v1033 = vld [vmem:[%s10] sm:$0xf]
  %v1034 = vld [vmem:[%s10 + $0x4] sm:$0xf]
  %v1035 = vld [vmem:[%s10 + $0x8] sm:$0xf]
  %v1036 = vld [vmem:[%s10 + $0xc] sm:$0xf]
  %v1037 = vld [vmem:[%s10 + $0x10] sm:$0xf]
  %v1038 = vld [vmem:[%s10 + $0x14] sm:$0xf]
  %v1039 = vld [vmem:[%s10 + $0x18] sm:$0xf]
  %v1040 = vld [vmem:[%s10 + $0x1c] sm:$0xf]
  %v1041 = vld [vmem:[%s11] sm:$0x1]
  %v1043 = vlaneseq
  %v1044 = vshrl.u32 %v1043, 7
  %v1045 = vsub.s32 0, %v1044
  %v1046 = vrot.slane %v1041, %v1045
  %v1056 = vunpack.c.l.b16 %v1033
  %v1057 = vunpack.c.l.b16 %v1034
  %v1058 = vunpack.c.l.b16 %v1035
  %v1059 = vunpack.c.l.b16 %v1036
  %v1060 = vunpack.c.l.b16 %v1037
  %v1061 = vunpack.c.l.b16 %v1038
  %v1062 = vunpack.c.l.b16 %v1039
  %v1063 = vunpack.c.l.b16 %v1040
  %v1064 = vpack.c.b16 %v1057, %v1056
  %v1065 = vpack.c.b16 %v1059, %v1058
  %v1066 = vpack.c.b16 %v1061, %v1060
  %v1067 = vpack.c.b16 %v1063, %v1062
  %vm1072 = vcmask 523264
  %v1074 = vsel %vm1072, %v1032, 0
  %1076 = vmatprep.subr.bf16.mxu0 0
  %1077 = vmatpush1.bf16.msra.mxu0 %v1064
  %1078 = vmatprep.subr.bf16.mxu0 0
  %1079 = vmatpush1.bf16.msra.mxu0 %v1065
  %1080 = vmatprep.subr.bf16.mxu0 0
  %1081 = vmatpush1.bf16.msra.mxu0 %v1066
  %1082 = vmatprep.subr.bf16.mxu0 0
  %1083 = vmatpush1.bf16.msra.mxu0 %v1067
  %1084 = vmatprep.subr.bf16.mxu0 0
  %1085 = vmatpush1.bf16.msra.mxu0 0
  %1086 = vmatprep.subr.bf16.mxu0 0
  %1087 = vmatpush1.bf16.msra.mxu0 0
  %1088 = vmatprep.subr.bf16.mxu0 0
  %1089 = vmatpush1.bf16.msra.mxu0 0
  %1090 = vmatprep.subr.bf16.mxu0 0
  %1091 = vmatpush1.bf16.msra.mxu0 0
  %1092 = vmatprep.subr.bf16.mxu0 0
  %1093 = vmatpush1.bf16.msra.mxu0 0
  %1094 = vmatprep.subr.bf16.mxu0 0
  %1095 = vmatpush1.bf16.msra.mxu0 0
  %1096 = vmatprep.subr.bf16.mxu0 0
  %1097 = vmatpush1.bf16.msra.mxu0 0
  %1098 = vmatprep.subr.bf16.mxu0 0
  %1099 = vmatpush1.bf16.msra.mxu0 0
  %1100 = vmatprep.subr.bf16.mxu0 0
  %1101 = vmatpush1.bf16.msra.mxu0 0
  %1102 = vmatprep.subr.bf16.mxu0 0
  %1103 = vmatpush1.bf16.msra.mxu0 0
  %1104 = vmatprep.subr.bf16.mxu0 0
  %1105 = vmatpush1.bf16.msra.mxu0 0
  %1106 = vmatprep.subr.bf16.mxu0 0
  %1107 = vmatpush1.bf16.msra.mxu0 0
  %1108 = vmatprep.mubr.bf16.mxu0 0
  %1109 = vmatmul.mubr.bf16.gmra.mrb[0].mxu0 %v1074
  %v1110 = vpop.f32.mrb[0].mxu0
  %v1111 = vadd.f32 %v1046, %v1110
  %v1112 = vpop.f32.mrb[0].mxu0
  %v1113 = vpop.f32.mrb[0].mxu0
  %v1114 = vadd.f32 %v1046, %v1113
  %v1115 = vpop.f32.mrb[0].mxu0
  %1116 = vdwg.mxu0
  %v1117 = vadd.f32 %v944, %v1111
  %v1118 = vadd.f32 %v945, %v1114
  %v1119 = vld [vmem:[%s12] sm:$0x1]
  %v1120 = vld [vmem:[%s13] sm:$0x1]
  %v1121 = vsel %vm82, %v1117, 0.0
  %1122 = vadd.xlane.f32.xlu0 %v1121
  %v1123 = vpop.xlane.xlu0 %1122
  %v1124 = vsel %vm82, %v1118, 0.0
  %1125 = vadd.xlane.f32.xlu0 %v1124
  %v1126 = vpop.xlane.xlu0 %1125
  %v1127 = vmul.f32 %v1123, %v909
  %v1128 = vmul.f32 %v1126, %v909
  %v1129 = vsub.f32 %v1117, %v1127
  %v1130 = vsub.f32 %v1118, %v1128
  %v1131 = vmul.f32 %v1129, %v1129
  %v1132 = vmul.f32 %v1130, %v1130
  %v1133 = vsel %vm82, %v1131, 0.0
  %1134 = vadd.xlane.f32.xlu0 %v1133
  %v1135 = vpop.xlane.xlu0 %1134
  %v1136 = vsel %vm82, %v1132, 0.0
  %1137 = vadd.xlane.f32.xlu0 %v1136
  %v1138 = vpop.xlane.xlu0 %1137
  %v1139 = vmul.f32 %v1135, %v909
  %v1140 = vmul.f32 %v1138, %v909
  %v1141 = vadd.f32 %v1139, 1e-12
  %v1142 = vadd.f32 %v1140, 1e-12
  %v1143 = vrsqrt.pop %v1141
  %v1144 = vrsqrt.pop %v1142
  %v1145 = vmul.f32 %v1129, %v1143
  %v1146 = vmul.f32 %v1130, %v1144
  %v1148 = vlaneseq
  %v1149 = vshrl.u32 %v1148, 7
  %v1150 = vsub.s32 0, %v1149
  %v1151 = vrot.slane %v1119, %v1150
  %v1153 = vmul.f32 %v1145, %v1151
  %v1154 = vmul.f32 %v1146, %v1151
  %v1156 = vlaneseq
  %v1157 = vshrl.u32 %v1156, 7
  %v1158 = vsub.s32 0, %v1157
  %v1159 = vrot.slane %v1120, %v1158
  %v1161 = vadd.f32 %v1153, %v1159
  %v1162 = vadd.f32 %v1154, %v1159
  %v1163 = vpack.c.bf16 %v1162, %v1161
  %v1165 = vunpack.c.l.b16 %v1163
  %v1166 = vunpack.c.h.b16 %v1163
  %v1167 = vpack.c.b16 %v1165, %v1165
  %v1168 = vpack.c.b16 %v1166, %v1166
  %vm1171 = vcmask 257024
  %1172 = vst.msk [vmem:[%s14] sm:$0xf] %vm1171, %v1167
  %1173 = vst.msk [vmem:[%s14 + $0x4] sm:$0xf] %vm1171, %v1168
  // Predicated region
  $region58: #{bert_forward.4} parent=0 // pred_check
    _
  $region59: #{bert_forward.4} parent=0 // pred_check_branch
    %1175 = sbr.rel (0) target = $region61
  $region60: #{bert_forward.4} parent=0 // pred_region
    _
  $region61: #{bert_forward.4} parent=0 // pred_fallthru
    _
  // Predicated region
  $region62: #{bert_forward.4} parent=0 // pred_check
    _
  $region63: #{bert_forward.4} parent=0 // pred_check_branch
    %1177 = sbr.rel (0) target = $region65
  $region64: #{bert_forward.4} parent=0 // pred_region
    _
  $region65: #{bert_forward.4} parent=0 // pred_fallthru
    _

</llo_original>
